<compile_context>
chip_gen: v6e
topology: v6e:2x2x1
jax: 0.10.0
libtpu: 0.0.40
codegen_flags: <defaults>
</compile_context>

<pallas_src>
import functools

import jax
import jax.numpy as jnp
import numpy as np
from jax.experimental import pallas as pl
from jax.experimental.pallas import tpu as pltpu


def _layernorm(v, g, b, eps):
    mu = jnp.mean(v, axis=-1, keepdims=True)
    var = jnp.mean((v - mu) ** 2, axis=-1, keepdims=True)
    return (v - mu) * jax.lax.rsqrt(var + eps) * g + b


def residual_attention_kernel(
    x_ref,                                # (S, D)    f32, full sequence of this batch element
    wq_ref, wk_ref, wv_ref,               # (H, D, hd) bf16, pre-split per head
    bq_ref, bk_ref, bv_ref,               # (H, 1, hd) f32
    wo_ref, bo_ref,                       # (H, hd, D) bf16, (1, D) f32
    g1_ref, be1_ref, g2_ref, be2_ref,     # (1, D)    f32
    w1_ref, b1_ref,                       # (D, 4D)   bf16, (1, 4D) f32
    w2_ref, b2_ref,                       # (4D, D)   bf16, (1, D) f32
    o_ref,                                # (TQ, D)   output tile
    h1_scratch,                           # (S, D)    bf16  LN1(x) cache (per batch element)
    k_scratch, v_scratch,                 # (H, S, hd) bf16  per-batch K/V cache
    *, num_heads, tq, mlp_chunk, eps=1e-5):
    qi = pl.program_id(1)
    S, D = x_ref.shape
    hd = D // num_heads
    hidden = w1_ref.shape[1]
    scale = 1.0 / float(hd) ** 0.5

    # ---- LN1 + K/V for the whole sequence: compute once per batch element (qi == 0) ----
    @pl.when(qi == 0)
    def _():
        xf = x_ref[...].astype(jnp.float32)
        hf = _layernorm(xf, g1_ref[...], be1_ref[...], eps).astype(jnp.bfloat16)
        h1_scratch[...] = hf
        # Per-head (D, hd) weights -> results land directly in (S, hd) slots: no lane slicing.
        for h in range(num_heads):
            k_scratch[h] = (jnp.dot(hf, wk_ref[h], preferred_element_type=jnp.float32)
                            + bk_ref[h]).astype(jnp.bfloat16)
            v_scratch[h] = (jnp.dot(hf, wv_ref[h], preferred_element_type=jnp.float32)
                            + bv_ref[h]).astype(jnp.bfloat16)

    # ---- Q projection for this tile of query rows (LN1 reused from the bf16 cache) ----
    row0 = pl.multiple_of(qi * tq, tq)
    h1 = h1_scratch[pl.ds(row0, tq), :]                    # (TQ, D) bf16
    q_parts = []
    for h in range(num_heads):
        qh = jnp.dot(h1, wq_ref[h], preferred_element_type=jnp.float32) + bq_ref[h]
        q_parts.append((qh * scale).astype(jnp.bfloat16))  # fold 1/sqrt(hd) into q once
    q_h = jnp.stack(q_parts, axis=0)                       # (H, TQ, hd), major-axis stack

    # ---- head-batched attention ----
    k_h = k_scratch[...]                                   # (H, S, hd) bf16
    v_h = v_scratch[...]
    scores = jnp.einsum('hqe,hke->hqk', q_h, k_h,
                        preferred_element_type=jnp.float32)    # (H, TQ, S)
    scores = scores - jnp.max(scores, axis=-1, keepdims=True)
    p = jnp.exp(scores)
    inv = pl.reciprocal(jnp.sum(p, axis=-1, keepdims=True), approx=True)   # EUP slot
    # Deferred normalization: unnormalized exp feeds the PV matmul; 1/sum hits (H,TQ,hd).
    pv = jnp.einsum('hqk,hke->hqe', p.astype(jnp.bfloat16), v_h,
                    preferred_element_type=jnp.float32)        # (H, TQ, hd)
    pv = (pv * inv).astype(jnp.bfloat16)

    # Output projection: sum_h pv[h] @ Wo[h]  accumulated straight into a (TQ, D) f32 acc
    acc = jnp.zeros((tq, D), jnp.float32)
    for h in range(num_heads):
        acc = acc + jnp.dot(pv[h], wo_ref[h], preferred_element_type=jnp.float32)

    x = x_ref[pl.ds(row0, tq), :].astype(jnp.float32)
    h_res = x + acc + bo_ref[...]                          # residual 1 (f32)

    # ---- LN2 + MLP (hidden dim chunked) + residual ----
    z = _layernorm(h_res, g2_ref[...], be2_ref[...], eps).astype(jnp.bfloat16)
    mlp = jnp.zeros((tq, D), jnp.float32)
    for c in range(hidden // mlp_chunk):
        sl = slice(c * mlp_chunk, (c + 1) * mlp_chunk)
        zc = jnp.dot(z, w1_ref[:, sl], preferred_element_type=jnp.float32) + b1_ref[:, sl]
        zc = jnp.maximum(zc, 0.0).astype(jnp.bfloat16)
        mlp = mlp + jnp.dot(zc, w2_ref[sl, :], preferred_element_type=jnp.float32)

    o_ref[...] = (h_res + mlp + b2_ref[...]).astype(o_ref.dtype)


def _pick_q_tile(s):
    for cand in (256, 128, 64, 32, 16, 8):
        if s >= cand and s % cand == 0:
            return cand
    return s


def _pick_mlp_chunk(hidden):
    if hidden <= 2048:
        return hidden
    for cand in (2048, 1024, 512, 256):
        if hidden % cand == 0:
            return cand
    return hidden


def _vmem_limit_bytes():
    # ~3/4 of physical VMEM: ~96 MiB on v5e/v6e (128 MiB), ~48 MiB on v7x (64 MiB).
    try:
        cap = int(pltpu.get_tpu_info().vmem_capacity_bytes)
        return int(cap * 3 // 4)
    except Exception:
        return 64 * 1024 * 1024


def residual_attention_block(x, params, num_heads):
    B, S, D = x.shape
    assert D % num_heads == 0, "d_model must be divisible by num_heads"
    hd = D // num_heads
    hidden = 4 * D
    f32, bf16 = jnp.float32, jnp.bfloat16
    tq = _pick_q_tile(S)
    # tq must satisfy the (8,128) block constraint unless it equals the full seq dim.
    assert tq == S or tq % 8 == 0
    n_qt = S // tq
    mlp_chunk = _pick_mlp_chunk(hidden)

    # ---- glue (pure JAX, outside the kernel): transpose / split / re-pack weights ----
    wqkv = params["in_proj_weight"]                        # (3D, D), rows = output dims

    def per_head(w):                                       # (D, D) -> (H, D_in, hd)
        return w.T.reshape(D, num_heads, hd).transpose(1, 0, 2).astype(bf16)

    wq = per_head(wqkv[:D])
    wk = per_head(wqkv[D:2 * D])
    wv = per_head(wqkv[2 * D:])
    bqkv = params["in_proj_bias"]
    bq = bqkv[:D].reshape(num_heads, 1, hd).astype(f32)
    bk = bqkv[D:2 * D].reshape(num_heads, 1, hd).astype(f32)
    bv = bqkv[2 * D:].reshape(num_heads, 1, hd).astype(f32)
    # out-proj weight re-packed per head (H, hd, D) -> per-head partial-product accumulation
    wo = params["out_proj_weight"].T.reshape(num_heads, hd, D).astype(bf16)
    bo = params["out_proj_bias"].reshape(1, D).astype(f32)
    g1 = params["ln1_gamma"].reshape(1, D).astype(f32)
    be1 = params["ln1_beta"].reshape(1, D).astype(f32)
    g2 = params["ln2_gamma"].reshape(1, D).astype(f32)
    be2 = params["ln2_beta"].reshape(1, D).astype(f32)
    w1 = params["dense1_weight"].T.astype(bf16)            # (D, 4D)
    b1 = params["dense1_bias"].reshape(1, hidden).astype(f32)
    w2 = params["dense2_weight"].T.astype(bf16)            # (4D, D)
    b2 = params["dense2_bias"].reshape(1, D).astype(f32)

    weights = (wq, wk, wv, bq, bk, bv, wo, bo, g1, be1, g2, be2, w1, b1, w2, b2)

    def const_spec(arr):
        nd = arr.ndim
        # Constant block index -> weights are DMA'd once and stay resident across the grid.
        return pl.BlockSpec(arr.shape, lambda b, qi, _nd=nd: (0,) * _nd)

    weight_bytes = sum(int(np.prod(w.shape)) * w.dtype.itemsize for w in weights)
    cost = pl.CostEstimate(
        flops=int(2 * B * S * (12 * D * D + 2 * S * D)),
        transcendentals=int(B * num_heads * S * S),
        bytes_accessed=int(weight_bytes + 2 * B * S * D * 4),
    )

    kernel = functools.partial(residual_attention_kernel, num_heads=num_heads,
                               tq=tq, mlp_chunk=mlp_chunk)
    return pl.pallas_call(
        kernel,
        out_shape=jax.ShapeDtypeStruct((B, S, D), x.dtype),
        grid_spec=pltpu.PrefetchScalarGridSpec(
            num_scalar_prefetch=0,
            grid=(B, n_qt),
            in_specs=[pl.BlockSpec((pl.Squeezed(), S, D), lambda b, qi: (b, 0, 0))]
                     + [const_spec(w) for w in weights],
            out_specs=pl.BlockSpec((pl.Squeezed(), tq, D), lambda b, qi: (b, qi, 0)),
            scratch_shapes=[pltpu.VMEM((S, D), jnp.bfloat16),
                            pltpu.VMEM((num_heads, S, hd), jnp.bfloat16),
                            pltpu.VMEM((num_heads, S, hd), jnp.bfloat16)],
        ),
        compiler_params=pltpu.CompilerParams(
            # q-tile axis is "arbitrary" (LN1/KV scratch is carried across it); batch is parallel.
            dimension_semantics=("parallel", "arbitrary"),
            vmem_limit_bytes=_vmem_limit_bytes(),
        ),
        cost_estimate=cost,
    )(x, *weights)


def reference(x, params, num_heads, eps=1e-5):
    """Pure-JAX f32 reference mirroring the PyTorch module's forward."""
    B, S, D = x.shape
    hd = D // num_heads
    x = x.astype(jnp.float32)

    def ln(v, g, b):
        mu = jnp.mean(v, axis=-1, keepdims=True)
        var = jnp.mean((v - mu) ** 2, axis=-1, keepdims=True)
        return (v - mu) * jax.lax.rsqrt(var + eps) * g + b

    h = ln(x, params["ln1_gamma"], params["ln1_beta"])
    qkv = h @ params["in_proj_weight"].T + params["in_proj_bias"]
    q, k, v = jnp.split(qkv, 3, axis=-1)
    q = q.reshape(B, S, num_heads, hd).transpose(0, 2, 1, 3)
    k = k.reshape(B, S, num_heads, hd).transpose(0, 2, 1, 3)
    v = v.reshape(B, S, num_heads, hd).transpose(0, 2, 1, 3)
    scores = jnp.einsum("bhqd,bhkd->bhqk", q, k) / jnp.sqrt(float(hd))
    p = jax.nn.softmax(scores, axis=-1)
    attn = jnp.einsum("bhqk,bhkd->bhqd", p, v).transpose(0, 2, 1, 3).reshape(B, S, D)
    attn = attn @ params["out_proj_weight"].T + params["out_proj_bias"]
    h_res = x + attn
    z = ln(h_res, params["ln2_gamma"], params["ln2_beta"])
    z = jnp.maximum(z @ params["dense1_weight"].T + params["dense1_bias"], 0.0)
    z = z @ params["dense2_weight"].T + params["dense2_bias"]
    return h_res + z


def init_params(key, d_model):
    ks = jax.random.split(key, 8)
    s = 0.02
    return {
        "in_proj_weight": s * jax.random.normal(ks[0], (3 * d_model, d_model), jnp.float32),
        "in_proj_bias": s * jax.random.normal(ks[1], (3 * d_model,), jnp.float32),
        "out_proj_weight": s * jax.random.normal(ks[2], (d_model, d_model), jnp.float32),
        "out_proj_bias": s * jax.random.normal(ks[3], (d_model,), jnp.float32),
        "ln1_gamma": jnp.ones((d_model,), jnp.float32),
        "ln1_beta": jnp.zeros((d_model,), jnp.float32),
        "ln2_gamma": jnp.ones((d_model,), jnp.float32),
        "ln2_beta": jnp.zeros((d_model,), jnp.float32),
        "dense1_weight": s * jax.random.normal(ks[4], (4 * d_model, d_model), jnp.float32),
        "dense1_bias": s * jax.random.normal(ks[5], (4 * d_model,), jnp.float32),
        "dense2_weight": s * jax.random.normal(ks[6], (d_model, 4 * d_model), jnp.float32),
        "dense2_bias": s * jax.random.normal(ks[7], (d_model,), jnp.float32),
    }


def _run_case(key, B, S, D, H):
    k_x, k_p = jax.random.split(key)
    x = jax.random.normal(k_x, (B, S, D), jnp.float32)
    params = init_params(k_p, D)
    out = jax.block_until_ready(residual_attention_block(x, params, num_heads=H))
    ref = reference(x, params, num_heads=H)
    # bf16 MXU operands vs f32 reference -> slightly relaxed tolerances.
    np.testing.assert_allclose(np.asarray(out), np.asarray(ref), rtol=2e-2, atol=5e-3)


if __name__ == "__main__":
    key = jax.random.PRNGKey(0)
    k1, k2 = jax.random.split(key)
    # Small shape matching the module spec (single q tile, sub-128 lanes).
    _run_case(k1, B=2, S=8, D=32, H=4)
    # Lane-aligned shape exercising multiple q tiles per batch element (LN1/KV-cache reuse path).
    _run_case(k2, B=2, S=512, D=128, H=4)
    print("KERNEL_OK")
</pallas_src>

<mosaic_0001>
module attributes {stable_mosaic.version = 11 : i64} {
  func.func @residual_attention_kernel(%arg0: i32, %arg1: i32, %arg2: memref<1x8x32xf32, #tpu.memory_space<vmem>>, %arg3: memref<4x32x8xbf16, #tpu.memory_space<vmem>>, %arg4: memref<4x32x8xbf16, #tpu.memory_space<vmem>>, %arg5: memref<4x32x8xbf16, #tpu.memory_space<vmem>>, %arg6: memref<4x1x8xf32, #tpu.memory_space<vmem>>, %arg7: memref<4x1x8xf32, #tpu.memory_space<vmem>>, %arg8: memref<4x1x8xf32, #tpu.memory_space<vmem>>, %arg9: memref<4x8x32xbf16, #tpu.memory_space<vmem>>, %arg10: memref<1x32xf32, #tpu.memory_space<vmem>>, %arg11: memref<1x32xf32, #tpu.memory_space<vmem>>, %arg12: memref<1x32xf32, #tpu.memory_space<vmem>>, %arg13: memref<1x32xf32, #tpu.memory_space<vmem>>, %arg14: memref<1x32xf32, #tpu.memory_space<vmem>>, %arg15: memref<32x128xbf16, #tpu.memory_space<vmem>>, %arg16: memref<1x128xf32, #tpu.memory_space<vmem>>, %arg17: memref<128x32xbf16, #tpu.memory_space<vmem>>, %arg18: memref<1x32xf32, #tpu.memory_space<vmem>>, %arg19: memref<1x8x32xf32, #tpu.memory_space<vmem>>, %arg20: memref<8x32xbf16, #tpu.memory_space<vmem>>, %arg21: memref<4x8x8xbf16, #tpu.memory_space<vmem>>, %arg22: memref<4x8x8xbf16, #tpu.memory_space<vmem>>) attributes {dimension_semantics = [#tpu.dimension_semantics<parallel>, #tpu.dimension_semantics<arbitrary>], iteration_bounds = array<i64: 2, 1>, scalar_prefetch = 0 : i64, scratch_operands = 3 : i64, tpu.core_type = #tpu.core_type<tc>, window_params = [{transform_indices = @transform_0, window_bounds = array<i64: 1, 8, 32>}, {pipeline_mode = #tpu.pipeline_mode<synchronous>, transform_indices = @transform_1, window_bounds = array<i64: 4, 32, 8>}, {pipeline_mode = #tpu.pipeline_mode<synchronous>, transform_indices = @transform_2, window_bounds = array<i64: 4, 32, 8>}, {pipeline_mode = #tpu.pipeline_mode<synchronous>, transform_indices = @transform_3, window_bounds = array<i64: 4, 32, 8>}, {pipeline_mode = #tpu.pipeline_mode<synchronous>, transform_indices = @transform_4, window_bounds = array<i64: 4, 1, 8>}, {pipeline_mode = #tpu.pipeline_mode<synchronous>, transform_indices = @transform_5, window_bounds = array<i64: 4, 1, 8>}, {pipeline_mode = #tpu.pipeline_mode<synchronous>, transform_indices = @transform_6, window_bounds = array<i64: 4, 1, 8>}, {pipeline_mode = #tpu.pipeline_mode<synchronous>, transform_indices = @transform_7, window_bounds = array<i64: 4, 8, 32>}, {pipeline_mode = #tpu.pipeline_mode<synchronous>, transform_indices = @transform_8, window_bounds = array<i64: 1, 32>}, {pipeline_mode = #tpu.pipeline_mode<synchronous>, transform_indices = @transform_9, window_bounds = array<i64: 1, 32>}, {pipeline_mode = #tpu.pipeline_mode<synchronous>, transform_indices = @transform_10, window_bounds = array<i64: 1, 32>}, {pipeline_mode = #tpu.pipeline_mode<synchronous>, transform_indices = @transform_11, window_bounds = array<i64: 1, 32>}, {pipeline_mode = #tpu.pipeline_mode<synchronous>, transform_indices = @transform_12, window_bounds = array<i64: 1, 32>}, {pipeline_mode = #tpu.pipeline_mode<synchronous>, transform_indices = @transform_13, window_bounds = array<i64: 32, 128>}, {pipeline_mode = #tpu.pipeline_mode<synchronous>, transform_indices = @transform_14, window_bounds = array<i64: 1, 128>}, {pipeline_mode = #tpu.pipeline_mode<synchronous>, transform_indices = @transform_15, window_bounds = array<i64: 128, 32>}, {pipeline_mode = #tpu.pipeline_mode<synchronous>, transform_indices = @transform_16, window_bounds = array<i64: 1, 32>}, {transform_indices = @transform_17, window_bounds = array<i64: 1, 8, 32>}]} {
    %c0_i32 = arith.constant 0 : i32
    %0 = arith.cmpi eq, %arg1, %c0_i32 : i32
    %1 = arith.extui %0 : i1 to i32
    %c0_i32_0 = arith.constant 0 : i32
    %2 = arith.cmpi ne, %1, %c0_i32_0 : i32
    scf.if %2 {
      %c0_84 = arith.constant 0 : index
      %c0_85 = arith.constant 0 : index
      %c0_86 = arith.constant 0 : index
      %144 = vector.load %arg2[%c0_84, %c0_85, %c0_86] : memref<1x8x32xf32, #tpu.memory_space<vmem>>, vector<1x8x32xf32>
      %145 = vector.shape_cast %144 : vector<1x8x32xf32> to vector<8x32xf32>
      %c0_87 = arith.constant 0 : index
      %c0_88 = arith.constant 0 : index
      %146 = vector.load %arg11[%c0_87, %c0_88] : memref<1x32xf32, #tpu.memory_space<vmem>>, vector<1x32xf32>
      %c0_89 = arith.constant 0 : index
      %c0_90 = arith.constant 0 : index
      %147 = vector.load %arg12[%c0_89, %c0_90] : memref<1x32xf32, #tpu.memory_space<vmem>>, vector<1x32xf32>
      %cst_91 = arith.constant dense<0.000000e+00> : vector<8xf32>
      %148 = vector.multi_reduction <add>, %145, %cst_91 [1] : vector<8x32xf32> to vector<8xf32>
      %149 = vector.shape_cast %148 : vector<8xf32> to vector<8x1xf32>
      %cst_92 = arith.constant 3.200000e+01 : f32
      %150 = vector.broadcast %cst_92 : f32 to vector<8x1xf32>
      %151 = arith.divf %149, %150 : vector<8x1xf32>
      %152 = vector.broadcast %151 : vector<8x1xf32> to vector<8x32xf32>
      %153 = arith.subf %145, %152 : vector<8x32xf32>
      %154 = arith.mulf %153, %153 : vector<8x32xf32>
      %cst_93 = arith.constant dense<0.000000e+00> : vector<8xf32>
      %155 = vector.multi_reduction <add>, %154, %cst_93 [1] : vector<8x32xf32> to vector<8xf32>
      %156 = vector.shape_cast %155 : vector<8xf32> to vector<8x1xf32>
      %cst_94 = arith.constant 3.200000e+01 : f32
      %157 = vector.broadcast %cst_94 : f32 to vector<8x1xf32>
      %158 = arith.divf %156, %157 : vector<8x1xf32>
      %159 = vector.broadcast %151 : vector<8x1xf32> to vector<8x32xf32>
      %160 = arith.subf %145, %159 : vector<8x32xf32>
      %cst_95 = arith.constant 9.99999974E-6 : f32
      %161 = vector.broadcast %cst_95 : f32 to vector<8x1xf32>
      %162 = arith.addf %158, %161 : vector<8x1xf32>
      %163 = math.rsqrt %162 : vector<8x1xf32>
      %164 = vector.broadcast %163 : vector<8x1xf32> to vector<8x32xf32>
      %165 = arith.mulf %160, %164 : vector<8x32xf32>
      %166 = vector.broadcast %146 : vector<1x32xf32> to vector<8x32xf32>
      %167 = arith.mulf %165, %166 : vector<8x32xf32>
      %168 = vector.broadcast %147 : vector<1x32xf32> to vector<8x32xf32>
      %169 = arith.addf %167, %168 : vector<8x32xf32>
      %170 = arith.truncf %169 : vector<8x32xf32> to vector<8x32xbf16>
      %c0_96 = arith.constant 0 : index
      %c0_97 = arith.constant 0 : index
      %171 = vector.load %arg20[%c0_96, %c0_97] : memref<8x32xbf16, #tpu.memory_space<vmem>>, vector<8x32xbf16>
      tpu.vector_store %arg20[%c0_96, %c0_97], %170 {strides = array<i32>} : memref<8x32xbf16, #tpu.memory_space<vmem>>, vector<8x32xbf16>,
      %c0_98 = arith.constant 0 : index
      %c0_99 = arith.constant 0 : index
      %c0_100 = arith.constant 0 : index
      %172 = vector.load %arg4[%c0_98, %c0_99, %c0_100] : memref<4x32x8xbf16, #tpu.memory_space<vmem>>, vector<1x32x8xbf16>
      %173 = vector.shape_cast %172 : vector<1x32x8xbf16> to vector<32x8xbf16>
      %cst_101 = arith.constant dense<0.000000e+00> : vector<8x8xf32>
      %174 = tpu.matmul %170, %173, %cst_101 {dimension_numbers = #tpu.dot_dimension_numbers<[1], [0], [0], [1], [0, 0, 1, 1], [], []>} : vector<8x32xbf16>, vector<32x8xbf16>, vector<8x8xf32> -> vector<8x8xf32>
      %c0_102 = arith.constant 0 : index
      %c0_103 = arith.constant 0 : index
      %c0_104 = arith.constant 0 : index
      %175 = vector.load %arg7[%c0_102, %c0_103, %c0_104] : memref<4x1x8xf32, #tpu.memory_space<vmem>>, vector<1x1x8xf32>
      %176 = vector.shape_cast %175 : vector<1x1x8xf32> to vector<1x8xf32>
      %177 = vector.broadcast %176 : vector<1x8xf32> to vector<8x8xf32>
      %178 = arith.addf %174, %177 : vector<8x8xf32>
      %179 = arith.truncf %178 : vector<8x8xf32> to vector<8x8xbf16>
      %c0_105 = arith.constant 0 : index
      %c0_106 = arith.constant 0 : index
      %c0_107 = arith.constant 0 : index
      %180 = vector.load %arg21[%c0_105, %c0_106, %c0_107] : memref<4x8x8xbf16, #tpu.memory_space<vmem>>, vector<1x8x8xbf16>
      %181 = vector.shape_cast %180 : vector<1x8x8xbf16> to vector<8x8xbf16>
      %182 = vector.shape_cast %179 : vector<8x8xbf16> to vector<1x8x8xbf16>
      tpu.vector_store %arg21[%c0_105, %c0_106, %c0_107], %182 {strides = array<i32>} : memref<4x8x8xbf16, #tpu.memory_space<vmem>>, vector<1x8x8xbf16>,
      %c0_108 = arith.constant 0 : index
      %c0_109 = arith.constant 0 : index
      %c0_110 = arith.constant 0 : index
      %183 = vector.load %arg5[%c0_108, %c0_109, %c0_110] : memref<4x32x8xbf16, #tpu.memory_space<vmem>>, vector<1x32x8xbf16>
      %184 = vector.shape_cast %183 : vector<1x32x8xbf16> to vector<32x8xbf16>
      %cst_111 = arith.constant dense<0.000000e+00> : vector<8x8xf32>
      %185 = tpu.matmul %170, %184, %cst_111 {dimension_numbers = #tpu.dot_dimension_numbers<[1], [0], [0], [1], [0, 0, 1, 1], [], []>} : vector<8x32xbf16>, vector<32x8xbf16>, vector<8x8xf32> -> vector<8x8xf32>
      %c0_112 = arith.constant 0 : index
      %c0_113 = arith.constant 0 : index
      %c0_114 = arith.constant 0 : index
      %186 = vector.load %arg8[%c0_112, %c0_113, %c0_114] : memref<4x1x8xf32, #tpu.memory_space<vmem>>, vector<1x1x8xf32>
      %187 = vector.shape_cast %186 : vector<1x1x8xf32> to vector<1x8xf32>
      %188 = vector.broadcast %187 : vector<1x8xf32> to vector<8x8xf32>
      %189 = arith.addf %185, %188 : vector<8x8xf32>
      %190 = arith.truncf %189 : vector<8x8xf32> to vector<8x8xbf16>
      %c0_115 = arith.constant 0 : index
      %c0_116 = arith.constant 0 : index
      %c0_117 = arith.constant 0 : index
      %191 = vector.load %arg22[%c0_115, %c0_116, %c0_117] : memref<4x8x8xbf16, #tpu.memory_space<vmem>>, vector<1x8x8xbf16>
      %192 = vector.shape_cast %191 : vector<1x8x8xbf16> to vector<8x8xbf16>
      %193 = vector.shape_cast %190 : vector<8x8xbf16> to vector<1x8x8xbf16>
      tpu.vector_store %arg22[%c0_115, %c0_116, %c0_117], %193 {strides = array<i32>} : memref<4x8x8xbf16, #tpu.memory_space<vmem>>, vector<1x8x8xbf16>,
      %c1_118 = arith.constant 1 : index
      %c0_119 = arith.constant 0 : index
      %c0_120 = arith.constant 0 : index
      %194 = vector.load %arg4[%c1_118, %c0_119, %c0_120] : memref<4x32x8xbf16, #tpu.memory_space<vmem>>, vector<1x32x8xbf16>
      %195 = vector.shape_cast %194 : vector<1x32x8xbf16> to vector<32x8xbf16>
      %cst_121 = arith.constant dense<0.000000e+00> : vector<8x8xf32>
      %196 = tpu.matmul %170, %195, %cst_121 {dimension_numbers = #tpu.dot_dimension_numbers<[1], [0], [0], [1], [0, 0, 1, 1], [], []>} : vector<8x32xbf16>, vector<32x8xbf16>, vector<8x8xf32> -> vector<8x8xf32>
      %c1_122 = arith.constant 1 : index
      %c0_123 = arith.constant 0 : index
      %c0_124 = arith.constant 0 : index
      %197 = vector.load %arg7[%c1_122, %c0_123, %c0_124] : memref<4x1x8xf32, #tpu.memory_space<vmem>>, vector<1x1x8xf32>
      %198 = vector.shape_cast %197 : vector<1x1x8xf32> to vector<1x8xf32>
      %199 = vector.broadcast %198 : vector<1x8xf32> to vector<8x8xf32>
      %200 = arith.addf %196, %199 : vector<8x8xf32>
      %201 = arith.truncf %200 : vector<8x8xf32> to vector<8x8xbf16>
      %c1_125 = arith.constant 1 : index
      %c0_126 = arith.constant 0 : index
      %c0_127 = arith.constant 0 : index
      %202 = vector.load %arg21[%c1_125, %c0_126, %c0_127] : memref<4x8x8xbf16, #tpu.memory_space<vmem>>, vector<1x8x8xbf16>
      %203 = vector.shape_cast %202 : vector<1x8x8xbf16> to vector<8x8xbf16>
      %204 = vector.shape_cast %201 : vector<8x8xbf16> to vector<1x8x8xbf16>
      tpu.vector_store %arg21[%c1_125, %c0_126, %c0_127], %204 {strides = array<i32>} : memref<4x8x8xbf16, #tpu.memory_space<vmem>>, vector<1x8x8xbf16>,
      %c1_128 = arith.constant 1 : index
      %c0_129 = arith.constant 0 : index
      %c0_130 = arith.constant 0 : index
      %205 = vector.load %arg5[%c1_128, %c0_129, %c0_130] : memref<4x32x8xbf16, #tpu.memory_space<vmem>>, vector<1x32x8xbf16>
      %206 = vector.shape_cast %205 : vector<1x32x8xbf16> to vector<32x8xbf16>
      %cst_131 = arith.constant dense<0.000000e+00> : vector<8x8xf32>
      %207 = tpu.matmul %170, %206, %cst_131 {dimension_numbers = #tpu.dot_dimension_numbers<[1], [0], [0], [1], [0, 0, 1, 1], [], []>} : vector<8x32xbf16>, vector<32x8xbf16>, vector<8x8xf32> -> vector<8x8xf32>
      %c1_132 = arith.constant 1 : index
      %c0_133 = arith.constant 0 : index
      %c0_134 = arith.constant 0 : index
      %208 = vector.load %arg8[%c1_132, %c0_133, %c0_134] : memref<4x1x8xf32, #tpu.memory_space<vmem>>, vector<1x1x8xf32>
      %209 = vector.shape_cast %208 : vector<1x1x8xf32> to vector<1x8xf32>
      %210 = vector.broadcast %209 : vector<1x8xf32> to vector<8x8xf32>
      %211 = arith.addf %207, %210 : vector<8x8xf32>
      %212 = arith.truncf %211 : vector<8x8xf32> to vector<8x8xbf16>
      %c1_135 = arith.constant 1 : index
      %c0_136 = arith.constant 0 : index
      %c0_137 = arith.constant 0 : index
      %213 = vector.load %arg22[%c1_135, %c0_136, %c0_137] : memref<4x8x8xbf16, #tpu.memory_space<vmem>>, vector<1x8x8xbf16>
      %214 = vector.shape_cast %213 : vector<1x8x8xbf16> to vector<8x8xbf16>
      %215 = vector.shape_cast %212 : vector<8x8xbf16> to vector<1x8x8xbf16>
      tpu.vector_store %arg22[%c1_135, %c0_136, %c0_137], %215 {strides = array<i32>} : memref<4x8x8xbf16, #tpu.memory_space<vmem>>, vector<1x8x8xbf16>,
      %c2_138 = arith.constant 2 : index
      %c0_139 = arith.constant 0 : index
      %c0_140 = arith.constant 0 : index
      %216 = vector.load %arg4[%c2_138, %c0_139, %c0_140] : memref<4x32x8xbf16, #tpu.memory_space<vmem>>, vector<1x32x8xbf16>
      %217 = vector.shape_cast %216 : vector<1x32x8xbf16> to vector<32x8xbf16>
      %cst_141 = arith.constant dense<0.000000e+00> : vector<8x8xf32>
      %218 = tpu.matmul %170, %217, %cst_141 {dimension_numbers = #tpu.dot_dimension_numbers<[1], [0], [0], [1], [0, 0, 1, 1], [], []>} : vector<8x32xbf16>, vector<32x8xbf16>, vector<8x8xf32> -> vector<8x8xf32>
      %c2_142 = arith.constant 2 : index
      %c0_143 = arith.constant 0 : index
      %c0_144 = arith.constant 0 : index
      %219 = vector.load %arg7[%c2_142, %c0_143, %c0_144] : memref<4x1x8xf32, #tpu.memory_space<vmem>>, vector<1x1x8xf32>
      %220 = vector.shape_cast %219 : vector<1x1x8xf32> to vector<1x8xf32>
      %221 = vector.broadcast %220 : vector<1x8xf32> to vector<8x8xf32>
      %222 = arith.addf %218, %221 : vector<8x8xf32>
      %223 = arith.truncf %222 : vector<8x8xf32> to vector<8x8xbf16>
      %c2_145 = arith.constant 2 : index
      %c0_146 = arith.constant 0 : index
      %c0_147 = arith.constant 0 : index
      %224 = vector.load %arg21[%c2_145, %c0_146, %c0_147] : memref<4x8x8xbf16, #tpu.memory_space<vmem>>, vector<1x8x8xbf16>
      %225 = vector.shape_cast %224 : vector<1x8x8xbf16> to vector<8x8xbf16>
      %226 = vector.shape_cast %223 : vector<8x8xbf16> to vector<1x8x8xbf16>
      tpu.vector_store %arg21[%c2_145, %c0_146, %c0_147], %226 {strides = array<i32>} : memref<4x8x8xbf16, #tpu.memory_space<vmem>>, vector<1x8x8xbf16>,
      %c2_148 = arith.constant 2 : index
      %c0_149 = arith.constant 0 : index
      %c0_150 = arith.constant 0 : index
      %227 = vector.load %arg5[%c2_148, %c0_149, %c0_150] : memref<4x32x8xbf16, #tpu.memory_space<vmem>>, vector<1x32x8xbf16>
      %228 = vector.shape_cast %227 : vector<1x32x8xbf16> to vector<32x8xbf16>
      %cst_151 = arith.constant dense<0.000000e+00> : vector<8x8xf32>
      %229 = tpu.matmul %170, %228, %cst_151 {dimension_numbers = #tpu.dot_dimension_numbers<[1], [0], [0], [1], [0, 0, 1, 1], [], []>} : vector<8x32xbf16>, vector<32x8xbf16>, vector<8x8xf32> -> vector<8x8xf32>
      %c2_152 = arith.constant 2 : index
      %c0_153 = arith.constant 0 : index
      %c0_154 = arith.constant 0 : index
      %230 = vector.load %arg8[%c2_152, %c0_153, %c0_154] : memref<4x1x8xf32, #tpu.memory_space<vmem>>, vector<1x1x8xf32>
      %231 = vector.shape_cast %230 : vector<1x1x8xf32> to vector<1x8xf32>
      %232 = vector.broadcast %231 : vector<1x8xf32> to vector<8x8xf32>
      %233 = arith.addf %229, %232 : vector<8x8xf32>
      %234 = arith.truncf %233 : vector<8x8xf32> to vector<8x8xbf16>
      %c2_155 = arith.constant 2 : index
      %c0_156 = arith.constant 0 : index
      %c0_157 = arith.constant 0 : index
      %235 = vector.load %arg22[%c2_155, %c0_156, %c0_157] : memref<4x8x8xbf16, #tpu.memory_space<vmem>>, vector<1x8x8xbf16>
      %236 = vector.shape_cast %235 : vector<1x8x8xbf16> to vector<8x8xbf16>
      %237 = vector.shape_cast %234 : vector<8x8xbf16> to vector<1x8x8xbf16>
      tpu.vector_store %arg22[%c2_155, %c0_156, %c0_157], %237 {strides = array<i32>} : memref<4x8x8xbf16, #tpu.memory_space<vmem>>, vector<1x8x8xbf16>,
      %c3_158 = arith.constant 3 : index
      %c0_159 = arith.constant 0 : index
      %c0_160 = arith.constant 0 : index
      %238 = vector.load %arg4[%c3_158, %c0_159, %c0_160] : memref<4x32x8xbf16, #tpu.memory_space<vmem>>, vector<1x32x8xbf16>
      %239 = vector.shape_cast %238 : vector<1x32x8xbf16> to vector<32x8xbf16>
      %cst_161 = arith.constant dense<0.000000e+00> : vector<8x8xf32>
      %240 = tpu.matmul %170, %239, %cst_161 {dimension_numbers = #tpu.dot_dimension_numbers<[1], [0], [0], [1], [0, 0, 1, 1], [], []>} : vector<8x32xbf16>, vector<32x8xbf16>, vector<8x8xf32> -> vector<8x8xf32>
      %c3_162 = arith.constant 3 : index
      %c0_163 = arith.constant 0 : index
      %c0_164 = arith.constant 0 : index
      %241 = vector.load %arg7[%c3_162, %c0_163, %c0_164] : memref<4x1x8xf32, #tpu.memory_space<vmem>>, vector<1x1x8xf32>
      %242 = vector.shape_cast %241 : vector<1x1x8xf32> to vector<1x8xf32>
      %243 = vector.broadcast %242 : vector<1x8xf32> to vector<8x8xf32>
      %244 = arith.addf %240, %243 : vector<8x8xf32>
      %245 = arith.truncf %244 : vector<8x8xf32> to vector<8x8xbf16>
      %c3_165 = arith.constant 3 : index
      %c0_166 = arith.constant 0 : index
      %c0_167 = arith.constant 0 : index
      %246 = vector.load %arg21[%c3_165, %c0_166, %c0_167] : memref<4x8x8xbf16, #tpu.memory_space<vmem>>, vector<1x8x8xbf16>
      %247 = vector.shape_cast %246 : vector<1x8x8xbf16> to vector<8x8xbf16>
      %248 = vector.shape_cast %245 : vector<8x8xbf16> to vector<1x8x8xbf16>
      tpu.vector_store %arg21[%c3_165, %c0_166, %c0_167], %248 {strides = array<i32>} : memref<4x8x8xbf16, #tpu.memory_space<vmem>>, vector<1x8x8xbf16>,
      %c3_168 = arith.constant 3 : index
      %c0_169 = arith.constant 0 : index
      %c0_170 = arith.constant 0 : index
      %249 = vector.load %arg5[%c3_168, %c0_169, %c0_170] : memref<4x32x8xbf16, #tpu.memory_space<vmem>>, vector<1x32x8xbf16>
      %250 = vector.shape_cast %249 : vector<1x32x8xbf16> to vector<32x8xbf16>
      %cst_171 = arith.constant dense<0.000000e+00> : vector<8x8xf32>
      %251 = tpu.matmul %170, %250, %cst_171 {dimension_numbers = #tpu.dot_dimension_numbers<[1], [0], [0], [1], [0, 0, 1, 1], [], []>} : vector<8x32xbf16>, vector<32x8xbf16>, vector<8x8xf32> -> vector<8x8xf32>
      %c3_172 = arith.constant 3 : index
      %c0_173 = arith.constant 0 : index
      %c0_174 = arith.constant 0 : index
      %252 = vector.load %arg8[%c3_172, %c0_173, %c0_174] : memref<4x1x8xf32, #tpu.memory_space<vmem>>, vector<1x1x8xf32>
      %253 = vector.shape_cast %252 : vector<1x1x8xf32> to vector<1x8xf32>
      %254 = vector.broadcast %253 : vector<1x8xf32> to vector<8x8xf32>
      %255 = arith.addf %251, %254 : vector<8x8xf32>
      %256 = arith.truncf %255 : vector<8x8xf32> to vector<8x8xbf16>
      %c3_175 = arith.constant 3 : index
      %c0_176 = arith.constant 0 : index
      %c0_177 = arith.constant 0 : index
      %257 = vector.load %arg22[%c3_175, %c0_176, %c0_177] : memref<4x8x8xbf16, #tpu.memory_space<vmem>>, vector<1x8x8xbf16>
      %258 = vector.shape_cast %257 : vector<1x8x8xbf16> to vector<8x8xbf16>
      %259 = vector.shape_cast %256 : vector<8x8xbf16> to vector<1x8x8xbf16>
      tpu.vector_store %arg22[%c3_175, %c0_176, %c0_177], %259 {strides = array<i32>} : memref<4x8x8xbf16, #tpu.memory_space<vmem>>, vector<1x8x8xbf16>,
    } else {
    }
    %c8_i32 = arith.constant 8 : i32
    %3 = arith.muli %arg1, %c8_i32 : i32
    %4 = tpu.assume_multiple %3, 8 : i32
    %5 = arith.index_cast %4 : i32 to index
    %c0 = arith.constant 0 : index
    %6 = vector.load %arg20[%5, %c0] : memref<8x32xbf16, #tpu.memory_space<vmem>>, vector<8x32xbf16>
    %c0_1 = arith.constant 0 : index
    %c0_2 = arith.constant 0 : index
    %c0_3 = arith.constant 0 : index
    %7 = vector.load %arg3[%c0_1, %c0_2, %c0_3] : memref<4x32x8xbf16, #tpu.memory_space<vmem>>, vector<1x32x8xbf16>
    %8 = vector.shape_cast %7 : vector<1x32x8xbf16> to vector<32x8xbf16>
    %cst = arith.constant dense<0.000000e+00> : vector<8x8xf32>
    %9 = tpu.matmul %6, %8, %cst {dimension_numbers = #tpu.dot_dimension_numbers<[1], [0], [0], [1], [0, 0, 1, 1], [], []>} : vector<8x32xbf16>, vector<32x8xbf16>, vector<8x8xf32> -> vector<8x8xf32>
    %c0_4 = arith.constant 0 : index
    %c0_5 = arith.constant 0 : index
    %c0_6 = arith.constant 0 : index
    %10 = vector.load %arg6[%c0_4, %c0_5, %c0_6] : memref<4x1x8xf32, #tpu.memory_space<vmem>>, vector<1x1x8xf32>
    %11 = vector.shape_cast %10 : vector<1x1x8xf32> to vector<1x8xf32>
    %12 = vector.broadcast %11 : vector<1x8xf32> to vector<8x8xf32>
    %13 = arith.addf %9, %12 : vector<8x8xf32>
    %cst_7 = arith.constant 0.353553385 : f32
    %14 = vector.broadcast %cst_7 : f32 to vector<8x8xf32>
    %15 = arith.mulf %13, %14 : vector<8x8xf32>
    %16 = arith.truncf %15 : vector<8x8xf32> to vector<8x8xbf16>
    %c1 = arith.constant 1 : index
    %c0_8 = arith.constant 0 : index
    %c0_9 = arith.constant 0 : index
    %17 = vector.load %arg3[%c1, %c0_8, %c0_9] : memref<4x32x8xbf16, #tpu.memory_space<vmem>>, vector<1x32x8xbf16>
    %18 = vector.shape_cast %17 : vector<1x32x8xbf16> to vector<32x8xbf16>
    %cst_10 = arith.constant dense<0.000000e+00> : vector<8x8xf32>
    %19 = tpu.matmul %6, %18, %cst_10 {dimension_numbers = #tpu.dot_dimension_numbers<[1], [0], [0], [1], [0, 0, 1, 1], [], []>} : vector<8x32xbf16>, vector<32x8xbf16>, vector<8x8xf32> -> vector<8x8xf32>
    %c1_11 = arith.constant 1 : index
    %c0_12 = arith.constant 0 : index
    %c0_13 = arith.constant 0 : index
    %20 = vector.load %arg6[%c1_11, %c0_12, %c0_13] : memref<4x1x8xf32, #tpu.memory_space<vmem>>, vector<1x1x8xf32>
    %21 = vector.shape_cast %20 : vector<1x1x8xf32> to vector<1x8xf32>
    %22 = vector.broadcast %21 : vector<1x8xf32> to vector<8x8xf32>
    %23 = arith.addf %19, %22 : vector<8x8xf32>
    %cst_14 = arith.constant 0.353553385 : f32
    %24 = vector.broadcast %cst_14 : f32 to vector<8x8xf32>
    %25 = arith.mulf %23, %24 : vector<8x8xf32>
    %26 = arith.truncf %25 : vector<8x8xf32> to vector<8x8xbf16>
    %c2 = arith.constant 2 : index
    %c0_15 = arith.constant 0 : index
    %c0_16 = arith.constant 0 : index
    %27 = vector.load %arg3[%c2, %c0_15, %c0_16] : memref<4x32x8xbf16, #tpu.memory_space<vmem>>, vector<1x32x8xbf16>
    %28 = vector.shape_cast %27 : vector<1x32x8xbf16> to vector<32x8xbf16>
    %cst_17 = arith.constant dense<0.000000e+00> : vector<8x8xf32>
    %29 = tpu.matmul %6, %28, %cst_17 {dimension_numbers = #tpu.dot_dimension_numbers<[1], [0], [0], [1], [0, 0, 1, 1], [], []>} : vector<8x32xbf16>, vector<32x8xbf16>, vector<8x8xf32> -> vector<8x8xf32>
    %c2_18 = arith.constant 2 : index
    %c0_19 = arith.constant 0 : index
    %c0_20 = arith.constant 0 : index
    %30 = vector.load %arg6[%c2_18, %c0_19, %c0_20] : memref<4x1x8xf32, #tpu.memory_space<vmem>>, vector<1x1x8xf32>
    %31 = vector.shape_cast %30 : vector<1x1x8xf32> to vector<1x8xf32>
    %32 = vector.broadcast %31 : vector<1x8xf32> to vector<8x8xf32>
    %33 = arith.addf %29, %32 : vector<8x8xf32>
    %cst_21 = arith.constant 0.353553385 : f32
    %34 = vector.broadcast %cst_21 : f32 to vector<8x8xf32>
    %35 = arith.mulf %33, %34 : vector<8x8xf32>
    %36 = arith.truncf %35 : vector<8x8xf32> to vector<8x8xbf16>
    %c3 = arith.constant 3 : index
    %c0_22 = arith.constant 0 : index
    %c0_23 = arith.constant 0 : index
    %37 = vector.load %arg3[%c3, %c0_22, %c0_23] : memref<4x32x8xbf16, #tpu.memory_space<vmem>>, vector<1x32x8xbf16>
    %38 = vector.shape_cast %37 : vector<1x32x8xbf16> to vector<32x8xbf16>
    %cst_24 = arith.constant dense<0.000000e+00> : vector<8x8xf32>
    %39 = tpu.matmul %6, %38, %cst_24 {dimension_numbers = #tpu.dot_dimension_numbers<[1], [0], [0], [1], [0, 0, 1, 1], [], []>} : vector<8x32xbf16>, vector<32x8xbf16>, vector<8x8xf32> -> vector<8x8xf32>
    %c3_25 = arith.constant 3 : index
    %c0_26 = arith.constant 0 : index
    %c0_27 = arith.constant 0 : index
    %40 = vector.load %arg6[%c3_25, %c0_26, %c0_27] : memref<4x1x8xf32, #tpu.memory_space<vmem>>, vector<1x1x8xf32>
    %41 = vector.shape_cast %40 : vector<1x1x8xf32> to vector<1x8xf32>
    %42 = vector.broadcast %41 : vector<1x8xf32> to vector<8x8xf32>
    %43 = arith.addf %39, %42 : vector<8x8xf32>
    %cst_28 = arith.constant 0.353553385 : f32
    %44 = vector.broadcast %cst_28 : f32 to vector<8x8xf32>
    %45 = arith.mulf %43, %44 : vector<8x8xf32>
    %46 = arith.truncf %45 : vector<8x8xf32> to vector<8x8xbf16>
    %47 = vector.shape_cast %16 : vector<8x8xbf16> to vector<1x8x8xbf16>
    %48 = vector.shape_cast %26 : vector<8x8xbf16> to vector<1x8x8xbf16>
    %49 = vector.shape_cast %36 : vector<8x8xbf16> to vector<1x8x8xbf16>
    %50 = vector.shape_cast %46 : vector<8x8xbf16> to vector<1x8x8xbf16>
    %51 = tpu.concatenate %47, %48, %49, %50 in 0 : vector<1x8x8xbf16>, vector<1x8x8xbf16>, vector<1x8x8xbf16>, vector<1x8x8xbf16> -> vector<4x8x8xbf16>
    %c0_29 = arith.constant 0 : index
    %c0_30 = arith.constant 0 : index
    %c0_31 = arith.constant 0 : index
    %52 = vector.load %arg21[%c0_29, %c0_30, %c0_31] : memref<4x8x8xbf16, #tpu.memory_space<vmem>>, vector<4x8x8xbf16>
    %c0_32 = arith.constant 0 : index
    %c0_33 = arith.constant 0 : index
    %c0_34 = arith.constant 0 : index
    %53 = vector.load %arg22[%c0_32, %c0_33, %c0_34] : memref<4x8x8xbf16, #tpu.memory_space<vmem>>, vector<4x8x8xbf16>
    "tpu.trace_start"() <{level = 10 : i32, message = "hqe,hke->hqk"}> : () -> ()
    %cst_35 = arith.constant dense<0.000000e+00> : vector<4x8x8xf32>
    %54 = tpu.matmul %51, %52, %cst_35 {dimension_numbers = #tpu.dot_dimension_numbers<[2], [2], [1], [1], [0, 0, 0, 1, 1, 1], [0], [0]>} : vector<4x8x8xbf16>, vector<4x8x8xbf16>, vector<4x8x8xf32> -> vector<4x8x8xf32>
    "tpu.trace_stop"() : () -> ()
    %cst_36 = arith.constant dense<0xFF800000> : vector<4x8xf32>
    %55 = vector.multi_reduction <maximumf>, %54, %cst_36 [2] : vector<4x8x8xf32> to vector<4x8xf32>
    %56 = vector.shape_cast %55 : vector<4x8xf32> to vector<4x8x1xf32>
    %57 = vector.broadcast %56 : vector<4x8x1xf32> to vector<4x8x8xf32>
    %58 = arith.subf %54, %57 : vector<4x8x8xf32>
    %59 = math.exp %58 : vector<4x8x8xf32>
    %cst_37 = arith.constant dense<0.000000e+00> : vector<4x8xf32>
    %60 = vector.multi_reduction <add>, %59, %cst_37 [2] : vector<4x8x8xf32> to vector<4x8xf32>
    %61 = vector.shape_cast %60 : vector<4x8xf32> to vector<4x8x1xf32>
    %62 = tpu.reciprocal %61 {approx = true} : vector<4x8x1xf32> -> vector<4x8x1xf32>
    %63 = arith.truncf %59 : vector<4x8x8xf32> to vector<4x8x8xbf16>
    "tpu.trace_start"() <{level = 10 : i32, message = "hqk,hke->hqe"}> : () -> ()
    %cst_38 = arith.constant dense<0.000000e+00> : vector<4x8x8xf32>
    %64 = tpu.matmul %63, %53, %cst_38 {dimension_numbers = #tpu.dot_dimension_numbers<[2], [1], [1], [2], [0, 0, 0, 1, 1, 2], [0], [0]>} : vector<4x8x8xbf16>, vector<4x8x8xbf16>, vector<4x8x8xf32> -> vector<4x8x8xf32>
    "tpu.trace_stop"() : () -> ()
    %65 = vector.broadcast %62 : vector<4x8x1xf32> to vector<4x8x8xf32>
    %66 = arith.mulf %64, %65 : vector<4x8x8xf32>
    %67 = arith.truncf %66 : vector<4x8x8xf32> to vector<4x8x8xbf16>
    %cst_39 = arith.constant 0.000000e+00 : f32
    %68 = vector.broadcast %cst_39 : f32 to vector<8x32xf32>
    %69 = vector.extract_strided_slice %67 {offsets = [0, 0, 0], sizes = [1, 8, 8], strides = [1, 1, 1]} : vector<4x8x8xbf16> to vector<1x8x8xbf16>
    %70 = vector.shape_cast %69 : vector<1x8x8xbf16> to vector<8x8xbf16>
    %c0_40 = arith.constant 0 : index
    %c0_41 = arith.constant 0 : index
    %c0_42 = arith.constant 0 : index
    %71 = vector.load %arg9[%c0_40, %c0_41, %c0_42] : memref<4x8x32xbf16, #tpu.memory_space<vmem>>, vector<1x8x32xbf16>
    %72 = vector.shape_cast %71 : vector<1x8x32xbf16> to vector<8x32xbf16>
    %cst_43 = arith.constant dense<0.000000e+00> : vector<8x32xf32>
    %73 = tpu.matmul %70, %72, %cst_43 {dimension_numbers = #tpu.dot_dimension_numbers<[1], [0], [0], [1], [0, 0, 1, 1], [], []>} : vector<8x8xbf16>, vector<8x32xbf16>, vector<8x32xf32> -> vector<8x32xf32>
    %74 = arith.addf %68, %73 : vector<8x32xf32>
    %75 = vector.extract_strided_slice %67 {offsets = [1, 0, 0], sizes = [1, 8, 8], strides = [1, 1, 1]} : vector<4x8x8xbf16> to vector<1x8x8xbf16>
    %76 = vector.shape_cast %75 : vector<1x8x8xbf16> to vector<8x8xbf16>
    %c1_44 = arith.constant 1 : index
    %c0_45 = arith.constant 0 : index
    %c0_46 = arith.constant 0 : index
    %77 = vector.load %arg9[%c1_44, %c0_45, %c0_46] : memref<4x8x32xbf16, #tpu.memory_space<vmem>>, vector<1x8x32xbf16>
    %78 = vector.shape_cast %77 : vector<1x8x32xbf16> to vector<8x32xbf16>
    %cst_47 = arith.constant dense<0.000000e+00> : vector<8x32xf32>
    %79 = tpu.matmul %76, %78, %cst_47 {dimension_numbers = #tpu.dot_dimension_numbers<[1], [0], [0], [1], [0, 0, 1, 1], [], []>} : vector<8x8xbf16>, vector<8x32xbf16>, vector<8x32xf32> -> vector<8x32xf32>
    %80 = arith.addf %74, %79 : vector<8x32xf32>
    %81 = vector.extract_strided_slice %67 {offsets = [2, 0, 0], sizes = [1, 8, 8], strides = [1, 1, 1]} : vector<4x8x8xbf16> to vector<1x8x8xbf16>
    %82 = vector.shape_cast %81 : vector<1x8x8xbf16> to vector<8x8xbf16>
    %c2_48 = arith.constant 2 : index
    %c0_49 = arith.constant 0 : index
    %c0_50 = arith.constant 0 : index
    %83 = vector.load %arg9[%c2_48, %c0_49, %c0_50] : memref<4x8x32xbf16, #tpu.memory_space<vmem>>, vector<1x8x32xbf16>
    %84 = vector.shape_cast %83 : vector<1x8x32xbf16> to vector<8x32xbf16>
    %cst_51 = arith.constant dense<0.000000e+00> : vector<8x32xf32>
    %85 = tpu.matmul %82, %84, %cst_51 {dimension_numbers = #tpu.dot_dimension_numbers<[1], [0], [0], [1], [0, 0, 1, 1], [], []>} : vector<8x8xbf16>, vector<8x32xbf16>, vector<8x32xf32> -> vector<8x32xf32>
    %86 = arith.addf %80, %85 : vector<8x32xf32>
    %87 = vector.extract_strided_slice %67 {offsets = [3, 0, 0], sizes = [1, 8, 8], strides = [1, 1, 1]} : vector<4x8x8xbf16> to vector<1x8x8xbf16>
    %88 = vector.shape_cast %87 : vector<1x8x8xbf16> to vector<8x8xbf16>
    %c3_52 = arith.constant 3 : index
    %c0_53 = arith.constant 0 : index
    %c0_54 = arith.constant 0 : index
    %89 = vector.load %arg9[%c3_52, %c0_53, %c0_54] : memref<4x8x32xbf16, #tpu.memory_space<vmem>>, vector<1x8x32xbf16>
    %90 = vector.shape_cast %89 : vector<1x8x32xbf16> to vector<8x32xbf16>
    %cst_55 = arith.constant dense<0.000000e+00> : vector<8x32xf32>
    %91 = tpu.matmul %88, %90, %cst_55 {dimension_numbers = #tpu.dot_dimension_numbers<[1], [0], [0], [1], [0, 0, 1, 1], [], []>} : vector<8x8xbf16>, vector<8x32xbf16>, vector<8x32xf32> -> vector<8x32xf32>
    %92 = arith.addf %86, %91 : vector<8x32xf32>
    %c0_56 = arith.constant 0 : index
    %93 = arith.index_cast %4 : i32 to index
    %c0_57 = arith.constant 0 : index
    %94 = vector.load %arg2[%c0_56, %93, %c0_57] : memref<1x8x32xf32, #tpu.memory_space<vmem>>, vector<1x8x32xf32>
    %95 = vector.shape_cast %94 : vector<1x8x32xf32> to vector<8x32xf32>
    %96 = arith.addf %95, %92 : vector<8x32xf32>
    %c0_58 = arith.constant 0 : index
    %c0_59 = arith.constant 0 : index
    %97 = vector.load %arg10[%c0_58, %c0_59] : memref<1x32xf32, #tpu.memory_space<vmem>>, vector<1x32xf32>
    %98 = vector.broadcast %97 : vector<1x32xf32> to vector<8x32xf32>
    %99 = arith.addf %96, %98 : vector<8x32xf32>
    %c0_60 = arith.constant 0 : index
    %c0_61 = arith.constant 0 : index
    %100 = vector.load %arg13[%c0_60, %c0_61] : memref<1x32xf32, #tpu.memory_space<vmem>>, vector<1x32xf32>
    %c0_62 = arith.constant 0 : index
    %c0_63 = arith.constant 0 : index
    %101 = vector.load %arg14[%c0_62, %c0_63] : memref<1x32xf32, #tpu.memory_space<vmem>>, vector<1x32xf32>
    %cst_64 = arith.constant dense<0.000000e+00> : vector<8xf32>
    %102 = vector.multi_reduction <add>, %99, %cst_64 [1] : vector<8x32xf32> to vector<8xf32>
    %103 = vector.shape_cast %102 : vector<8xf32> to vector<8x1xf32>
    %cst_65 = arith.constant 3.200000e+01 : f32
    %104 = vector.broadcast %cst_65 : f32 to vector<8x1xf32>
    %105 = arith.divf %103, %104 : vector<8x1xf32>
    %106 = vector.broadcast %105 : vector<8x1xf32> to vector<8x32xf32>
    %107 = arith.subf %99, %106 : vector<8x32xf32>
    %108 = arith.mulf %107, %107 : vector<8x32xf32>
    %cst_66 = arith.constant dense<0.000000e+00> : vector<8xf32>
    %109 = vector.multi_reduction <add>, %108, %cst_66 [1] : vector<8x32xf32> to vector<8xf32>
    %110 = vector.shape_cast %109 : vector<8xf32> to vector<8x1xf32>
    %cst_67 = arith.constant 3.200000e+01 : f32
    %111 = vector.broadcast %cst_67 : f32 to vector<8x1xf32>
    %112 = arith.divf %110, %111 : vector<8x1xf32>
    %113 = vector.broadcast %105 : vector<8x1xf32> to vector<8x32xf32>
    %114 = arith.subf %99, %113 : vector<8x32xf32>
    %cst_68 = arith.constant 9.99999974E-6 : f32
    %115 = vector.broadcast %cst_68 : f32 to vector<8x1xf32>
    %116 = arith.addf %112, %115 : vector<8x1xf32>
    %117 = math.rsqrt %116 : vector<8x1xf32>
    %118 = vector.broadcast %117 : vector<8x1xf32> to vector<8x32xf32>
    %119 = arith.mulf %114, %118 : vector<8x32xf32>
    %120 = vector.broadcast %100 : vector<1x32xf32> to vector<8x32xf32>
    %121 = arith.mulf %119, %120 : vector<8x32xf32>
    %122 = vector.broadcast %101 : vector<1x32xf32> to vector<8x32xf32>
    %123 = arith.addf %121, %122 : vector<8x32xf32>
    %124 = arith.truncf %123 : vector<8x32xf32> to vector<8x32xbf16>
    %cst_69 = arith.constant 0.000000e+00 : f32
    %125 = vector.broadcast %cst_69 : f32 to vector<8x32xf32>
    %c0_70 = arith.constant 0 : index
    %c0_71 = arith.constant 0 : index
    %126 = vector.load %arg15[%c0_70, %c0_71] : memref<32x128xbf16, #tpu.memory_space<vmem>>, vector<32x128xbf16>
    %cst_72 = arith.constant dense<0.000000e+00> : vector<8x128xf32>
    %127 = tpu.matmul %124, %126, %cst_72 {dimension_numbers = #tpu.dot_dimension_numbers<[1], [0], [0], [1], [0, 0, 1, 1], [], []>} : vector<8x32xbf16>, vector<32x128xbf16>, vector<8x128xf32> -> vector<8x128xf32>
    %c0_73 = arith.constant 0 : index
    %c0_74 = arith.constant 0 : index
    %128 = vector.load %arg16[%c0_73, %c0_74] : memref<1x128xf32, #tpu.memory_space<vmem>>, vector<1x128xf32>
    %129 = vector.broadcast %128 : vector<1x128xf32> to vector<8x128xf32>
    %130 = arith.addf %127, %129 : vector<8x128xf32>
    %cst_75 = arith.constant 0.000000e+00 : f32
    %131 = vector.broadcast %cst_75 : f32 to vector<8x128xf32>
    %132 = arith.maximumf %130, %131 : vector<8x128xf32>
    %133 = arith.truncf %132 : vector<8x128xf32> to vector<8x128xbf16>
    %c0_76 = arith.constant 0 : index
    %c0_77 = arith.constant 0 : index
    %134 = vector.load %arg17[%c0_76, %c0_77] : memref<128x32xbf16, #tpu.memory_space<vmem>>, vector<128x32xbf16>
    %cst_78 = arith.constant dense<0.000000e+00> : vector<8x32xf32>
    %135 = tpu.matmul %133, %134, %cst_78 {dimension_numbers = #tpu.dot_dimension_numbers<[1], [0], [0], [1], [0, 0, 1, 1], [], []>} : vector<8x128xbf16>, vector<128x32xbf16>, vector<8x32xf32> -> vector<8x32xf32>
    %136 = arith.addf %125, %135 : vector<8x32xf32>
    %137 = arith.addf %99, %136 : vector<8x32xf32>
    %c0_79 = arith.constant 0 : index
    %c0_80 = arith.constant 0 : index
    %138 = vector.load %arg18[%c0_79, %c0_80] : memref<1x32xf32, #tpu.memory_space<vmem>>, vector<1x32xf32>
    %139 = vector.broadcast %138 : vector<1x32xf32> to vector<8x32xf32>
    %140 = arith.addf %137, %139 : vector<8x32xf32>
    %c0_81 = arith.constant 0 : index
    %c0_82 = arith.constant 0 : index
    %c0_83 = arith.constant 0 : index
    %141 = vector.load %arg19[%c0_81, %c0_82, %c0_83] : memref<1x8x32xf32, #tpu.memory_space<vmem>>, vector<1x8x32xf32>
    %142 = vector.shape_cast %141 : vector<1x8x32xf32> to vector<8x32xf32>
    %143 = vector.shape_cast %140 : vector<8x32xf32> to vector<1x8x32xf32>
    tpu.vector_store %arg19[%c0_81, %c0_82, %c0_83], %143 {strides = array<i32>} : memref<1x8x32xf32, #tpu.memory_space<vmem>>, vector<1x8x32xf32>,
    return
  }
  func.func @transform_0(%arg0: i32, %arg1: i32) -> (i32, i32, i32) {
    %c0_i32 = arith.constant 0 : i32
    %c0_i32_0 = arith.constant 0 : i32
    %c0_i32_1 = arith.constant 0 : i32
    return %arg0, %c0_i32, %c0_i32_0 : i32, i32, i32
  }
  func.func @transform_1(%arg0: i32, %arg1: i32) -> (i32, i32, i32) {
    %c0_i32 = arith.constant 0 : i32
    %c0_i32_0 = arith.constant 0 : i32
    %c0_i32_1 = arith.constant 0 : i32
    %c0_i32_2 = arith.constant 0 : i32
    return %c0_i32, %c0_i32_0, %c0_i32_1 : i32, i32, i32
  }
  func.func @transform_2(%arg0: i32, %arg1: i32) -> (i32, i32, i32) {
    %c0_i32 = arith.constant 0 : i32
    %c0_i32_0 = arith.constant 0 : i32
    %c0_i32_1 = arith.constant 0 : i32
    %c0_i32_2 = arith.constant 0 : i32
    return %c0_i32, %c0_i32_0, %c0_i32_1 : i32, i32, i32
  }
  func.func @transform_3(%arg0: i32, %arg1: i32) -> (i32, i32, i32) {
    %c0_i32 = arith.constant 0 : i32
    %c0_i32_0 = arith.constant 0 : i32
    %c0_i32_1 = arith.constant 0 : i32
    %c0_i32_2 = arith.constant 0 : i32
    return %c0_i32, %c0_i32_0, %c0_i32_1 : i32, i32, i32
  }
  func.func @transform_4(%arg0: i32, %arg1: i32) -> (i32, i32, i32) {
    %c0_i32 = arith.constant 0 : i32
    %c0_i32_0 = arith.constant 0 : i32
    %c0_i32_1 = arith.constant 0 : i32
    %c0_i32_2 = arith.constant 0 : i32
    return %c0_i32, %c0_i32_0, %c0_i32_1 : i32, i32, i32
  }
  func.func @transform_5(%arg0: i32, %arg1: i32) -> (i32, i32, i32) {
    %c0_i32 = arith.constant 0 : i32
    %c0_i32_0 = arith.constant 0 : i32
    %c0_i32_1 = arith.constant 0 : i32
    %c0_i32_2 = arith.constant 0 : i32
    return %c0_i32, %c0_i32_0, %c0_i32_1 : i32, i32, i32
  }
  func.func @transform_6(%arg0: i32, %arg1: i32) -> (i32, i32, i32) {
    %c0_i32 = arith.constant 0 : i32
    %c0_i32_0 = arith.constant 0 : i32
    %c0_i32_1 = arith.constant 0 : i32
    %c0_i32_2 = arith.constant 0 : i32
    return %c0_i32, %c0_i32_0, %c0_i32_1 : i32, i32, i32
  }
  func.func @transform_7(%arg0: i32, %arg1: i32) -> (i32, i32, i32) {
    %c0_i32 = arith.constant 0 : i32
    %c0_i32_0 = arith.constant 0 : i32
    %c0_i32_1 = arith.constant 0 : i32
    %c0_i32_2 = arith.constant 0 : i32
    return %c0_i32, %c0_i32_0, %c0_i32_1 : i32, i32, i32
  }
  func.func @transform_8(%arg0: i32, %arg1: i32) -> (i32, i32) {
    %c0_i32 = arith.constant 0 : i32
    %c0_i32_0 = arith.constant 0 : i32
    %c0_i32_1 = arith.constant 0 : i32
    return %c0_i32, %c0_i32_0 : i32, i32
  }
  func.func @transform_9(%arg0: i32, %arg1: i32) -> (i32, i32) {
    %c0_i32 = arith.constant 0 : i32
    %c0_i32_0 = arith.constant 0 : i32
    %c0_i32_1 = arith.constant 0 : i32
    return %c0_i32, %c0_i32_0 : i32, i32
  }
  func.func @transform_10(%arg0: i32, %arg1: i32) -> (i32, i32) {
    %c0_i32 = arith.constant 0 : i32
    %c0_i32_0 = arith.constant 0 : i32
    %c0_i32_1 = arith.constant 0 : i32
    return %c0_i32, %c0_i32_0 : i32, i32
  }
  func.func @transform_11(%arg0: i32, %arg1: i32) -> (i32, i32) {
    %c0_i32 = arith.constant 0 : i32
    %c0_i32_0 = arith.constant 0 : i32
    %c0_i32_1 = arith.constant 0 : i32
    return %c0_i32, %c0_i32_0 : i32, i32
  }
  func.func @transform_12(%arg0: i32, %arg1: i32) -> (i32, i32) {
    %c0_i32 = arith.constant 0 : i32
    %c0_i32_0 = arith.constant 0 : i32
    %c0_i32_1 = arith.constant 0 : i32
    return %c0_i32, %c0_i32_0 : i32, i32
  }
  func.func @transform_13(%arg0: i32, %arg1: i32) -> (i32, i32) {
    %c0_i32 = arith.constant 0 : i32
    %c0_i32_0 = arith.constant 0 : i32
    %c0_i32_1 = arith.constant 0 : i32
    return %c0_i32, %c0_i32_0 : i32, i32
  }
  func.func @transform_14(%arg0: i32, %arg1: i32) -> (i32, i32) {
    %c0_i32 = arith.constant 0 : i32
    %c0_i32_0 = arith.constant 0 : i32
    %c0_i32_1 = arith.constant 0 : i32
    return %c0_i32, %c0_i32_0 : i32, i32
  }
  func.func @transform_15(%arg0: i32, %arg1: i32) -> (i32, i32) {
    %c0_i32 = arith.constant 0 : i32
    %c0_i32_0 = arith.constant 0 : i32
    %c0_i32_1 = arith.constant 0 : i32
    return %c0_i32, %c0_i32_0 : i32, i32
  }
  func.func @transform_16(%arg0: i32, %arg1: i32) -> (i32, i32) {
    %c0_i32 = arith.constant 0 : i32
    %c0_i32_0 = arith.constant 0 : i32
    %c0_i32_1 = arith.constant 0 : i32
    return %c0_i32, %c0_i32_0 : i32, i32
  }
  func.func @transform_17(%arg0: i32, %arg1: i32) -> (i32, i32, i32) {
    %c0_i32 = arith.constant 0 : i32
    %c0_i32_0 = arith.constant 0 : i32
    return %arg0, %arg1, %c0_i32 : i32, i32, i32
  }
}

</mosaic_0001>

<llo_original>
// kernel: tpu_custom_call.1
$region0: #{tpu_custom_call.1}
  #allocation0 [shape = 'u32[]', space=smem, size = 0x4, offset = 0x4, fixed_abs, tag = 'smem constant byte address 0x4 - core index']
  #allocation1 [shape = 'u32[144,128]{1,0:T(1,128)}', space=vmem, size = 0x12000, scoped, tag = 'internal scratch']
  #allocation2 [shape = 'bf16[8,32]{1,0:T(8,128)(2,1)}', space=vmem, size = 0x800, scoped, tag = 'scratch operand']
  #allocation3 [shape = 'bf16[4,8,8]{2,1,0:T(8,128)(2,1)}', space=vmem, size = 0x2000, scoped, tag = 'scratch operand']
  #allocation4 [shape = 'bf16[4,8,8]{2,1,0:T(8,128)(2,1)}', space=vmem, size = 0x2000, scoped, tag = 'scratch operand']
  %s0 = inlined_call_operand.vmem [shape: f32[2,8,32], index: 0, kind: input, shape index: {}]
  %s1 = inlined_call_operand.vmem [shape: bf16[4,32,8], index: 1, kind: input, shape index: {}]
  %s2 = inlined_call_operand.vmem [shape: bf16[4,32,8], index: 2, kind: input, shape index: {}]
  %s3 = inlined_call_operand.vmem [shape: bf16[4,32,8], index: 3, kind: input, shape index: {}]
  %s4 = inlined_call_operand.vmem [shape: f32[4,1,8], index: 4, kind: input, shape index: {}]
  %s5 = inlined_call_operand.vmem [shape: f32[4,1,8], index: 5, kind: input, shape index: {}]
  %s6 = inlined_call_operand.vmem [shape: f32[4,1,8], index: 6, kind: input, shape index: {}]
  %s7 = inlined_call_operand.vmem [shape: bf16[4,8,32], index: 7, kind: input, shape index: {}]
  %s8 = inlined_call_operand.vmem [shape: f32[1,32], index: 8, kind: input, shape index: {}]
  %s9 = inlined_call_operand.vmem [shape: f32[1,32], index: 9, kind: input, shape index: {}]
  %s10 = inlined_call_operand.vmem [shape: f32[1,32], index: 10, kind: input, shape index: {}]
  %s11 = inlined_call_operand.vmem [shape: f32[1,32], index: 11, kind: input, shape index: {}]
  %s12 = inlined_call_operand.vmem [shape: f32[1,32], index: 12, kind: input, shape index: {}]
  %s13 = inlined_call_operand.vmem [shape: bf16[32,128], index: 13, kind: input, shape index: {}]
  %s14 = inlined_call_operand.vmem [shape: f32[1,128], index: 14, kind: input, shape index: {}]
  %s15 = inlined_call_operand.vmem [shape: bf16[128,32], index: 15, kind: input, shape index: {}]
  %s16 = inlined_call_operand.vmem [shape: f32[1,32], index: 16, kind: input, shape index: {}]
  %s17 = inlined_call_operand.hbm [shape: f32[2,8,32], index: 17, kind: output, shape index: {}]
  %s18 = sld [smem:[#allocation0]]
  $region105: #{tpu_custom_call.1} parent=0
    _
  %s20 = ssub.s32 1, %s18
  %s21 = scalar_select 0, %s20, %s18
  $region1: #{tpu_custom_call.1} parent=0
    #allocation5 [shape = 'u8[8192]{0}', space=vmem, size = 0x2000, scoped, tag = 'output window, operand 0']
    #allocation6 [shape = 's32[2]{0}', space=sflag, size = 0x8, scoped, tag = 'scoped memory for tpu_custom_call.1']
    %22 = vsyncpa [#allocation6], 0
    %s23 = scalar_lea.sflag [#allocation6], 1
    %24 = vsyncpa %s23, 0
    loop: start=0, step=1, limit=4
    $region2: #{tpu_custom_call.1} parent=1 // loop_pre_header
      _
    $region3: #{tpu_custom_call.1} parent=1 // loop_header
      %s26 = sphi 0, %s30
      %p27 = scmp.ge.s32.totalorder %s26, 4
      %s33 = sphi 0, %s45
      %s34 = sphi 0, %s41
      %s35 = sphi 0, %s33
      %s36 = sphi 0, %s34
      %s37 = sphi 0, %s35
      %s38 = sphi 0, %s36
      %s48 = sphi 0, %s50
      %s51 = sphi 0, %s48
      %s52 = sphi 0, %s51
      %s68 = sphi 0, %s52
      %s72 = sphi 0, %s72
      %s74 = sphi 0, %s72
      %s75 = sphi 0, %s74
      %s89 = sphi 0, %s75
      %s93 = sphi 0, %s93
      %s95 = sphi 0, %s93
      %s96 = sphi 0, %s95
      %s110 = sphi 0, %s96
      %s114 = sphi 0, %s114
      %s116 = sphi 0, %s114
      %s117 = sphi 0, %s116
      %s131 = sphi 0, %s117
      %s135 = sphi 0, %s135
      %s137 = sphi 0, %s135
      %s138 = sphi 0, %s137
      %s152 = sphi 0, %s138
      %s156 = sphi 0, %s156
      %s158 = sphi 0, %s156
      %s159 = sphi 0, %s158
      %s173 = sphi 0, %s159
      %s177 = sphi 0, %s177
      %s179 = sphi 0, %s177
      %s180 = sphi 0, %s179
      %s194 = sphi 0, %s180
      %s198 = sphi 0, %s198
      %s200 = sphi 0, %s198
      %s201 = sphi 0, %s200
      %s215 = sphi 0, %s201
      %s219 = sphi 0, %s219
      %s221 = sphi 0, %s219
      %s222 = sphi 0, %s221
      %s236 = sphi 0, %s222
      %s240 = sphi 0, %s240
      %s242 = sphi 0, %s240
      %s243 = sphi 0, %s242
      %s257 = sphi 0, %s243
      %s261 = sphi 0, %s261
      %s263 = sphi 0, %s261
      %s264 = sphi 0, %s263
      %s278 = sphi 0, %s264
      %s282 = sphi 0, %s282
      %s284 = sphi 0, %s282
      %s285 = sphi 0, %s284
      %s299 = sphi 0, %s285
      %s303 = sphi 0, %s303
      %s305 = sphi 0, %s303
      %s306 = sphi 0, %s305
      %s320 = sphi 0, %s306
      %s324 = sphi 0, %s324
      %s326 = sphi 0, %s324
      %s327 = sphi 0, %s326
      %s341 = sphi 0, %s327
      %s345 = sphi 0, %s345
      %s347 = sphi 0, %s345
      %s348 = sphi 0, %s347
      %s362 = sphi 0, %s348
      %s366 = sphi 0, %s366
      %s368 = sphi 0, %s366
      %s369 = sphi 0, %s368
      %s383 = sphi 0, %s369
      %s387 = sphi 0, %s387
      %s389 = sphi 0, %s387
      %s390 = sphi 0, %s389
      %s404 = sphi 0, %s390
      %s412 = sphi 0, %s414
      %s415 = sphi 0, %s412
      %s416 = sphi 0, %s415
      %s432 = sphi 0, %s416
    $region4: #{tpu_custom_call.1} parent=1 // loop_header_branch
      %29 = sbr.rel (%p27) target = $region8
    $region5: #{tpu_custom_call.1} parent=1 // loop_body
      %s31 = ssub.s32 %s26, 1
      %s32 = ssub.s32 %s26, 2
      %s39 = sadd.s32 1, %s34
      %p40 = scmp.ge.s32.totalorder %s39, 1
      %s41 = scalar_select %p40, 0, %s39
      %s42 = sadd.s32 1, %s33
      %s43 = scalar_select %p40, %s42, %s33
      %p44 = scmp.ge.s32.totalorder %s43, 2
      %s45 = scalar_select %p44, 0, %s43
      %s46 = ssub.s32 %s33, %s45
      %p47 = scmp.eq.s32.totalorder %s46, 0
      %s49 = sadd.s32 %s48, 1
      %s50 = scalar_select %p47, %s48, %s49
      %p53 = pneg %p47
      %p54 = scmp.eq.s32.totalorder %s26, 1
      %p55 = por %p53, %p54
      %p56 = scmp.ne.s32.totalorder %s48, %s51
      %p57 = scmp.eq.s32.totalorder %s26, 0
      %p58 = por %p56, %p57
      %p59 = scmp.ne.s32.totalorder %s48, %s51
      %p60 = scmp.eq.s32.totalorder %s31, 1
      %p61 = por %p59, %p60
      %p62 = scmp.ne.s32.totalorder %s51, %s52
      %p63 = scmp.eq.s32.totalorder %s31, 0
      %p64 = por %p62, %p63
      %p65 = scmp.ne.s32.totalorder %s51, %s52
      %p66 = scmp.eq.s32.totalorder %s32, 1
      %p67 = por %p65, %p66
      %p69 = scmp.ne.s32.totalorder %s52, %s68
      %p70 = scmp.eq.s32.totalorder %s32, 0
      %p71 = por %p69, %p70
      %s73 = sadd.s32 %s72, 1
      %p76 = scmp.eq.s32.totalorder %s26, 1
      %p77 = scmp.ne.s32.totalorder %s72, %s74
      %p78 = scmp.eq.s32.totalorder %s26, 0
      %p79 = por %p77, %p78
      %p80 = scmp.ne.s32.totalorder %s72, %s74
      %p81 = scmp.eq.s32.totalorder %s31, 1
      %p82 = por %p80, %p81
      %p83 = scmp.ne.s32.totalorder %s74, %s75
      %p84 = scmp.eq.s32.totalorder %s31, 0
      %p85 = por %p83, %p84
      %p86 = scmp.ne.s32.totalorder %s74, %s75
      %p87 = scmp.eq.s32.totalorder %s32, 1
      %p88 = por %p86, %p87
      %p90 = scmp.ne.s32.totalorder %s75, %s89
      %p91 = scmp.eq.s32.totalorder %s32, 0
      %p92 = por %p90, %p91
      %s94 = sadd.s32 %s93, 1
      %p97 = scmp.eq.s32.totalorder %s26, 1
      %p98 = scmp.ne.s32.totalorder %s93, %s95
      %p99 = scmp.eq.s32.totalorder %s26, 0
      %p100 = por %p98, %p99
      %p101 = scmp.ne.s32.totalorder %s93, %s95
      %p102 = scmp.eq.s32.totalorder %s31, 1
      %p103 = por %p101, %p102
      %p104 = scmp.ne.s32.totalorder %s95, %s96
      %p105 = scmp.eq.s32.totalorder %s31, 0
      %p106 = por %p104, %p105
      %p107 = scmp.ne.s32.totalorder %s95, %s96
      %p108 = scmp.eq.s32.totalorder %s32, 1
      %p109 = por %p107, %p108
      %p111 = scmp.ne.s32.totalorder %s96, %s110
      %p112 = scmp.eq.s32.totalorder %s32, 0
      %p113 = por %p111, %p112
      %s115 = sadd.s32 %s114, 1
      %p118 = scmp.eq.s32.totalorder %s26, 1
      %p119 = scmp.ne.s32.totalorder %s114, %s116
      %p120 = scmp.eq.s32.totalorder %s26, 0
      %p121 = por %p119, %p120
      %p122 = scmp.ne.s32.totalorder %s114, %s116
      %p123 = scmp.eq.s32.totalorder %s31, 1
      %p124 = por %p122, %p123
      %p125 = scmp.ne.s32.totalorder %s116, %s117
      %p126 = scmp.eq.s32.totalorder %s31, 0
      %p127 = por %p125, %p126
      %p128 = scmp.ne.s32.totalorder %s116, %s117
      %p129 = scmp.eq.s32.totalorder %s32, 1
      %p130 = por %p128, %p129
      %p132 = scmp.ne.s32.totalorder %s117, %s131
      %p133 = scmp.eq.s32.totalorder %s32, 0
      %p134 = por %p132, %p133
      %s136 = sadd.s32 %s135, 1
      %p139 = scmp.eq.s32.totalorder %s26, 1
      %p140 = scmp.ne.s32.totalorder %s135, %s137
      %p141 = scmp.eq.s32.totalorder %s26, 0
      %p142 = por %p140, %p141
      %p143 = scmp.ne.s32.totalorder %s135, %s137
      %p144 = scmp.eq.s32.totalorder %s31, 1
      %p145 = por %p143, %p144
      %p146 = scmp.ne.s32.totalorder %s137, %s138
      %p147 = scmp.eq.s32.totalorder %s31, 0
      %p148 = por %p146, %p147
      %p149 = scmp.ne.s32.totalorder %s137, %s138
      %p150 = scmp.eq.s32.totalorder %s32, 1
      %p151 = por %p149, %p150
      %p153 = scmp.ne.s32.totalorder %s138, %s152
      %p154 = scmp.eq.s32.totalorder %s32, 0
      %p155 = por %p153, %p154
      %s157 = sadd.s32 %s156, 1
      %p160 = scmp.eq.s32.totalorder %s26, 1
      %p161 = scmp.ne.s32.totalorder %s156, %s158
      %p162 = scmp.eq.s32.totalorder %s26, 0
      %p163 = por %p161, %p162
      %p164 = scmp.ne.s32.totalorder %s156, %s158
      %p165 = scmp.eq.s32.totalorder %s31, 1
      %p166 = por %p164, %p165
      %p167 = scmp.ne.s32.totalorder %s158, %s159
      %p168 = scmp.eq.s32.totalorder %s31, 0
      %p169 = por %p167, %p168
      %p170 = scmp.ne.s32.totalorder %s158, %s159
      %p171 = scmp.eq.s32.totalorder %s32, 1
      %p172 = por %p170, %p171
      %p174 = scmp.ne.s32.totalorder %s159, %s173
      %p175 = scmp.eq.s32.totalorder %s32, 0
      %p176 = por %p174, %p175
      %s178 = sadd.s32 %s177, 1
      %p181 = scmp.eq.s32.totalorder %s26, 1
      %p182 = scmp.ne.s32.totalorder %s177, %s179
      %p183 = scmp.eq.s32.totalorder %s26, 0
      %p184 = por %p182, %p183
      %p185 = scmp.ne.s32.totalorder %s177, %s179
      %p186 = scmp.eq.s32.totalorder %s31, 1
      %p187 = por %p185, %p186
      %p188 = scmp.ne.s32.totalorder %s179, %s180
      %p189 = scmp.eq.s32.totalorder %s31, 0
      %p190 = por %p188, %p189
      %p191 = scmp.ne.s32.totalorder %s179, %s180
      %p192 = scmp.eq.s32.totalorder %s32, 1
      %p193 = por %p191, %p192
      %p195 = scmp.ne.s32.totalorder %s180, %s194
      %p196 = scmp.eq.s32.totalorder %s32, 0
      %p197 = por %p195, %p196
      %s199 = sadd.s32 %s198, 1
      %p202 = scmp.eq.s32.totalorder %s26, 1
      %p203 = scmp.ne.s32.totalorder %s198, %s200
      %p204 = scmp.eq.s32.totalorder %s26, 0
      %p205 = por %p203, %p204
      %p206 = scmp.ne.s32.totalorder %s198, %s200
      %p207 = scmp.eq.s32.totalorder %s31, 1
      %p208 = por %p206, %p207
      %p209 = scmp.ne.s32.totalorder %s200, %s201
      %p210 = scmp.eq.s32.totalorder %s31, 0
      %p211 = por %p209, %p210
      %p212 = scmp.ne.s32.totalorder %s200, %s201
      %p213 = scmp.eq.s32.totalorder %s32, 1
      %p214 = por %p212, %p213
      %p216 = scmp.ne.s32.totalorder %s201, %s215
      %p217 = scmp.eq.s32.totalorder %s32, 0
      %p218 = por %p216, %p217
      %s220 = sadd.s32 %s219, 1
      %p223 = scmp.eq.s32.totalorder %s26, 1
      %p224 = scmp.ne.s32.totalorder %s219, %s221
      %p225 = scmp.eq.s32.totalorder %s26, 0
      %p226 = por %p224, %p225
      %p227 = scmp.ne.s32.totalorder %s219, %s221
      %p228 = scmp.eq.s32.totalorder %s31, 1
      %p229 = por %p227, %p228
      %p230 = scmp.ne.s32.totalorder %s221, %s222
      %p231 = scmp.eq.s32.totalorder %s31, 0
      %p232 = por %p230, %p231
      %p233 = scmp.ne.s32.totalorder %s221, %s222
      %p234 = scmp.eq.s32.totalorder %s32, 1
      %p235 = por %p233, %p234
      %p237 = scmp.ne.s32.totalorder %s222, %s236
      %p238 = scmp.eq.s32.totalorder %s32, 0
      %p239 = por %p237, %p238
      %s241 = sadd.s32 %s240, 1
      %p244 = scmp.eq.s32.totalorder %s26, 1
      %p245 = scmp.ne.s32.totalorder %s240, %s242
      %p246 = scmp.eq.s32.totalorder %s26, 0
      %p247 = por %p245, %p246
      %p248 = scmp.ne.s32.totalorder %s240, %s242
      %p249 = scmp.eq.s32.totalorder %s31, 1
      %p250 = por %p248, %p249
      %p251 = scmp.ne.s32.totalorder %s242, %s243
      %p252 = scmp.eq.s32.totalorder %s31, 0
      %p253 = por %p251, %p252
      %p254 = scmp.ne.s32.totalorder %s242, %s243
      %p255 = scmp.eq.s32.totalorder %s32, 1
      %p256 = por %p254, %p255
      %p258 = scmp.ne.s32.totalorder %s243, %s257
      %p259 = scmp.eq.s32.totalorder %s32, 0
      %p260 = por %p258, %p259
      %s262 = sadd.s32 %s261, 1
      %p265 = scmp.eq.s32.totalorder %s26, 1
      %p266 = scmp.ne.s32.totalorder %s261, %s263
      %p267 = scmp.eq.s32.totalorder %s26, 0
      %p268 = por %p266, %p267
      %p269 = scmp.ne.s32.totalorder %s261, %s263
      %p270 = scmp.eq.s32.totalorder %s31, 1
      %p271 = por %p269, %p270
      %p272 = scmp.ne.s32.totalorder %s263, %s264
      %p273 = scmp.eq.s32.totalorder %s31, 0
      %p274 = por %p272, %p273
      %p275 = scmp.ne.s32.totalorder %s263, %s264
      %p276 = scmp.eq.s32.totalorder %s32, 1
      %p277 = por %p275, %p276
      %p279 = scmp.ne.s32.totalorder %s264, %s278
      %p280 = scmp.eq.s32.totalorder %s32, 0
      %p281 = por %p279, %p280
      %s283 = sadd.s32 %s282, 1
      %p286 = scmp.eq.s32.totalorder %s26, 1
      %p287 = scmp.ne.s32.totalorder %s282, %s284
      %p288 = scmp.eq.s32.totalorder %s26, 0
      %p289 = por %p287, %p288
      %p290 = scmp.ne.s32.totalorder %s282, %s284
      %p291 = scmp.eq.s32.totalorder %s31, 1
      %p292 = por %p290, %p291
      %p293 = scmp.ne.s32.totalorder %s284, %s285
      %p294 = scmp.eq.s32.totalorder %s31, 0
      %p295 = por %p293, %p294
      %p296 = scmp.ne.s32.totalorder %s284, %s285
      %p297 = scmp.eq.s32.totalorder %s32, 1
      %p298 = por %p296, %p297
      %p300 = scmp.ne.s32.totalorder %s285, %s299
      %p301 = scmp.eq.s32.totalorder %s32, 0
      %p302 = por %p300, %p301
      %s304 = sadd.s32 %s303, 1
      %p307 = scmp.eq.s32.totalorder %s26, 1
      %p308 = scmp.ne.s32.totalorder %s303, %s305
      %p309 = scmp.eq.s32.totalorder %s26, 0
      %p310 = por %p308, %p309
      %p311 = scmp.ne.s32.totalorder %s303, %s305
      %p312 = scmp.eq.s32.totalorder %s31, 1
      %p313 = por %p311, %p312
      %p314 = scmp.ne.s32.totalorder %s305, %s306
      %p315 = scmp.eq.s32.totalorder %s31, 0
      %p316 = por %p314, %p315
      %p317 = scmp.ne.s32.totalorder %s305, %s306
      %p318 = scmp.eq.s32.totalorder %s32, 1
      %p319 = por %p317, %p318
      %p321 = scmp.ne.s32.totalorder %s306, %s320
      %p322 = scmp.eq.s32.totalorder %s32, 0
      %p323 = por %p321, %p322
      %s325 = sadd.s32 %s324, 1
      %p328 = scmp.eq.s32.totalorder %s26, 1
      %p329 = scmp.ne.s32.totalorder %s324, %s326
      %p330 = scmp.eq.s32.totalorder %s26, 0
      %p331 = por %p329, %p330
      %p332 = scmp.ne.s32.totalorder %s324, %s326
      %p333 = scmp.eq.s32.totalorder %s31, 1
      %p334 = por %p332, %p333
      %p335 = scmp.ne.s32.totalorder %s326, %s327
      %p336 = scmp.eq.s32.totalorder %s31, 0
      %p337 = por %p335, %p336
      %p338 = scmp.ne.s32.totalorder %s326, %s327
      %p339 = scmp.eq.s32.totalorder %s32, 1
      %p340 = por %p338, %p339
      %p342 = scmp.ne.s32.totalorder %s327, %s341
      %p343 = scmp.eq.s32.totalorder %s32, 0
      %p344 = por %p342, %p343
      %s346 = sadd.s32 %s345, 1
      %p349 = scmp.eq.s32.totalorder %s26, 1
      %p350 = scmp.ne.s32.totalorder %s345, %s347
      %p351 = scmp.eq.s32.totalorder %s26, 0
      %p352 = por %p350, %p351
      %p353 = scmp.ne.s32.totalorder %s345, %s347
      %p354 = scmp.eq.s32.totalorder %s31, 1
      %p355 = por %p353, %p354
      %p356 = scmp.ne.s32.totalorder %s347, %s348
      %p357 = scmp.eq.s32.totalorder %s31, 0
      %p358 = por %p356, %p357
      %p359 = scmp.ne.s32.totalorder %s347, %s348
      %p360 = scmp.eq.s32.totalorder %s32, 1
      %p361 = por %p359, %p360
      %p363 = scmp.ne.s32.totalorder %s348, %s362
      %p364 = scmp.eq.s32.totalorder %s32, 0
      %p365 = por %p363, %p364
      %s367 = sadd.s32 %s366, 1
      %p370 = scmp.eq.s32.totalorder %s26, 1
      %p371 = scmp.ne.s32.totalorder %s366, %s368
      %p372 = scmp.eq.s32.totalorder %s26, 0
      %p373 = por %p371, %p372
      %p374 = scmp.ne.s32.totalorder %s366, %s368
      %p375 = scmp.eq.s32.totalorder %s31, 1
      %p376 = por %p374, %p375
      %p377 = scmp.ne.s32.totalorder %s368, %s369
      %p378 = scmp.eq.s32.totalorder %s31, 0
      %p379 = por %p377, %p378
      %p380 = scmp.ne.s32.totalorder %s368, %s369
      %p381 = scmp.eq.s32.totalorder %s32, 1
      %p382 = por %p380, %p381
      %p384 = scmp.ne.s32.totalorder %s369, %s383
      %p385 = scmp.eq.s32.totalorder %s32, 0
      %p386 = por %p384, %p385
      %s388 = sadd.s32 %s387, 1
      %p391 = scmp.eq.s32.totalorder %s26, 1
      %p392 = scmp.ne.s32.totalorder %s387, %s389
      %p393 = scmp.eq.s32.totalorder %s26, 0
      %p394 = por %p392, %p393
      %p395 = scmp.ne.s32.totalorder %s387, %s389
      %p396 = scmp.eq.s32.totalorder %s31, 1
      %p397 = por %p395, %p396
      %p398 = scmp.ne.s32.totalorder %s389, %s390
      %p399 = scmp.eq.s32.totalorder %s31, 0
      %p400 = por %p398, %p399
      %p401 = scmp.ne.s32.totalorder %s389, %s390
      %p402 = scmp.eq.s32.totalorder %s32, 1
      %p403 = por %p401, %p402
      %p405 = scmp.ne.s32.totalorder %s390, %s404
      %p406 = scmp.eq.s32.totalorder %s32, 0
      %p407 = por %p405, %p406
      %s408 = ssub.s32 %s33, %s45
      %s409 = ssub.s32 %s34, %s41
      %s410 = sor.u32 %s408, %s409
      %p411 = scmp.eq.s32.totalorder %s410, 0
      %s413 = sadd.s32 %s412, 1
      %s414 = scalar_select %p411, %s412, %s413
      %p417 = pneg %p411
      %p418 = scmp.eq.s32.totalorder %s26, 1
      %p419 = por %p417, %p418
      %p420 = scmp.ne.s32.totalorder %s412, %s415
      %p421 = scmp.eq.s32.totalorder %s26, 0
      %p422 = por %p420, %p421
      %p423 = scmp.ne.s32.totalorder %s412, %s415
      %p424 = scmp.eq.s32.totalorder %s31, 1
      %p425 = por %p423, %p424
      %p426 = scmp.ne.s32.totalorder %s415, %s416
      %p427 = scmp.eq.s32.totalorder %s31, 0
      %p428 = por %p426, %p427
      %p429 = scmp.ne.s32.totalorder %s415, %s416
      %p430 = scmp.eq.s32.totalorder %s32, 1
      %p431 = por %p429, %p430
      %p433 = scmp.ne.s32.totalorder %s416, %s432
      %p434 = scmp.eq.s32.totalorder %s32, 0
      %p435 = por %p433, %p434
      %p436 = scmp.le.s32.totalorder 1, %s26
      %p437 = scmp.lt.s32.totalorder %s26, 3
      %p438 = pnand %p436, %p437
      %p439 = pneg %p438
      // Predicated region
      $region9: #{tpu_custom_call.1} parent=5 // pred_check
        _
      $region10: #{tpu_custom_call.1} parent=5 // pred_check_branch
        %441 = sbr.rel (%p438) target = $region12
      $region11: #{tpu_custom_call.1} parent=5 // pred_region
        %s442 = ssub.s32 %s26, 1
        // Predicated region
        $region13: #{tpu_custom_call.1} parent=11 // pred_check
          %p443 = pneg %p85
        $region14: #{tpu_custom_call.1} parent=11 // pred_check_branch
          %445 = sbr.rel (%p443) target = $region16
        $region15: #{tpu_custom_call.1} parent=11 // pred_region
          _
        $region16: #{tpu_custom_call.1} parent=11 // pred_fallthru
          _
        // Predicated region
        $region17: #{tpu_custom_call.1} parent=11 // pred_check
          %p446 = pneg %p106
        $region18: #{tpu_custom_call.1} parent=11 // pred_check_branch
          %448 = sbr.rel (%p446) target = $region20
        $region19: #{tpu_custom_call.1} parent=11 // pred_region
          _
        $region20: #{tpu_custom_call.1} parent=11 // pred_fallthru
          _
        // Predicated region
        $region21: #{tpu_custom_call.1} parent=11 // pred_check
          %p449 = pneg %p127
        $region22: #{tpu_custom_call.1} parent=11 // pred_check_branch
          %451 = sbr.rel (%p449) target = $region24
        $region23: #{tpu_custom_call.1} parent=11 // pred_region
          _
        $region24: #{tpu_custom_call.1} parent=11 // pred_fallthru
          _
        // Predicated region
        $region25: #{tpu_custom_call.1} parent=11 // pred_check
          %p452 = pneg %p148
        $region26: #{tpu_custom_call.1} parent=11 // pred_check_branch
          %454 = sbr.rel (%p452) target = $region28
        $region27: #{tpu_custom_call.1} parent=11 // pred_region
          _
        $region28: #{tpu_custom_call.1} parent=11 // pred_fallthru
          _
        // Predicated region
        $region29: #{tpu_custom_call.1} parent=11 // pred_check
          %p455 = pneg %p169
        $region30: #{tpu_custom_call.1} parent=11 // pred_check_branch
          %457 = sbr.rel (%p455) target = $region32
        $region31: #{tpu_custom_call.1} parent=11 // pred_region
          _
        $region32: #{tpu_custom_call.1} parent=11 // pred_fallthru
          _
        // Predicated region
        $region33: #{tpu_custom_call.1} parent=11 // pred_check
          %p458 = pneg %p190
        $region34: #{tpu_custom_call.1} parent=11 // pred_check_branch
          %460 = sbr.rel (%p458) target = $region36
        $region35: #{tpu_custom_call.1} parent=11 // pred_region
          _
        $region36: #{tpu_custom_call.1} parent=11 // pred_fallthru
          _
        // Predicated region
        $region37: #{tpu_custom_call.1} parent=11 // pred_check
          %p461 = pneg %p211
        $region38: #{tpu_custom_call.1} parent=11 // pred_check_branch
          %463 = sbr.rel (%p461) target = $region40
        $region39: #{tpu_custom_call.1} parent=11 // pred_region
          _
        $region40: #{tpu_custom_call.1} parent=11 // pred_fallthru
          _
        // Predicated region
        $region41: #{tpu_custom_call.1} parent=11 // pred_check
          %p464 = pneg %p232
        $region42: #{tpu_custom_call.1} parent=11 // pred_check_branch
          %466 = sbr.rel (%p464) target = $region44
        $region43: #{tpu_custom_call.1} parent=11 // pred_region
          _
        $region44: #{tpu_custom_call.1} parent=11 // pred_fallthru
          _
        // Predicated region
        $region45: #{tpu_custom_call.1} parent=11 // pred_check
          %p467 = pneg %p253
        $region46: #{tpu_custom_call.1} parent=11 // pred_check_branch
          %469 = sbr.rel (%p467) target = $region48
        $region47: #{tpu_custom_call.1} parent=11 // pred_region
          _
        $region48: #{tpu_custom_call.1} parent=11 // pred_fallthru
          _
        // Predicated region
        $region49: #{tpu_custom_call.1} parent=11 // pred_check
          %p470 = pneg %p274
        $region50: #{tpu_custom_call.1} parent=11 // pred_check_branch
          %472 = sbr.rel (%p470) target = $region52
        $region51: #{tpu_custom_call.1} parent=11 // pred_region
          _
        $region52: #{tpu_custom_call.1} parent=11 // pred_fallthru
          _
        // Predicated region
        $region53: #{tpu_custom_call.1} parent=11 // pred_check
          %p473 = pneg %p295
        $region54: #{tpu_custom_call.1} parent=11 // pred_check_branch
          %475 = sbr.rel (%p473) target = $region56
        $region55: #{tpu_custom_call.1} parent=11 // pred_region
          _
        $region56: #{tpu_custom_call.1} parent=11 // pred_fallthru
          _
        // Predicated region
        $region57: #{tpu_custom_call.1} parent=11 // pred_check
          %p476 = pneg %p316
        $region58: #{tpu_custom_call.1} parent=11 // pred_check_branch
          %478 = sbr.rel (%p476) target = $region60
        $region59: #{tpu_custom_call.1} parent=11 // pred_region
          _
        $region60: #{tpu_custom_call.1} parent=11 // pred_fallthru
          _
        // Predicated region
        $region61: #{tpu_custom_call.1} parent=11 // pred_check
          %p479 = pneg %p337
        $region62: #{tpu_custom_call.1} parent=11 // pred_check_branch
          %481 = sbr.rel (%p479) target = $region64
        $region63: #{tpu_custom_call.1} parent=11 // pred_region
          _
        $region64: #{tpu_custom_call.1} parent=11 // pred_fallthru
          _
        // Predicated region
        $region65: #{tpu_custom_call.1} parent=11 // pred_check
          %p482 = pneg %p358
        $region66: #{tpu_custom_call.1} parent=11 // pred_check_branch
          %484 = sbr.rel (%p482) target = $region68
        $region67: #{tpu_custom_call.1} parent=11 // pred_region
          _
        $region68: #{tpu_custom_call.1} parent=11 // pred_fallthru
          _
        // Predicated region
        $region69: #{tpu_custom_call.1} parent=11 // pred_check
          %p485 = pneg %p379
        $region70: #{tpu_custom_call.1} parent=11 // pred_check_branch
          %487 = sbr.rel (%p485) target = $region72
        $region71: #{tpu_custom_call.1} parent=11 // pred_region
          _
        $region72: #{tpu_custom_call.1} parent=11 // pred_fallthru
          _
        // Predicated region
        $region73: #{tpu_custom_call.1} parent=11 // pred_check
          %p488 = pneg %p400
        $region74: #{tpu_custom_call.1} parent=11 // pred_check_branch
          %490 = sbr.rel (%p488) target = $region76
        $region75: #{tpu_custom_call.1} parent=11 // pred_region
          _
        $region76: #{tpu_custom_call.1} parent=11 // pred_fallthru
          _
      $region12: #{tpu_custom_call.1} parent=5 // pred_fallthru
        _
      %p491 = scmp.lt.s32.totalorder %s26, 2
      // Predicated region
      $region77: #{tpu_custom_call.1} parent=5 // pred_check
        %p492 = pneg %p491
      $region78: #{tpu_custom_call.1} parent=5 // pred_check_branch
        %494 = sbr.rel (%p492) target = $region80
      $region79: #{tpu_custom_call.1} parent=5 // pred_region
        // Predicated region
        $region81: #{tpu_custom_call.1} parent=79 // pred_check
          %p495 = pneg %p58
        $region82: #{tpu_custom_call.1} parent=79 // pred_check_branch
          %497 = sbr.rel (%p495) target = $region84
        $region83: #{tpu_custom_call.1} parent=79 // pred_region
          %p498 = scmp.lt.s32.totalorder %s33, 1
          %s499 = scalar_select %p498, %s33, 1
          %s500 = smul.addr %s499, 8
          %s501 = scalar_lea.vmem %s0, %s500
        $region84: #{tpu_custom_call.1} parent=79 // pred_fallthru
          _
      $region80: #{tpu_custom_call.1} parent=5 // pred_fallthru
        _
      %p502 = scmp.le.s32.totalorder 1, %s26
      %p503 = scmp.lt.s32.totalorder %s26, 3
      %p504 = pnand %p502, %p503
      %p505 = pneg %p504
      // Predicated region
      $region85: #{tpu_custom_call.1} parent=5 // pred_check
        _
      $region86: #{tpu_custom_call.1} parent=5 // pred_check_branch
        %507 = sbr.rel (%p504) target = $region88
      $region87: #{tpu_custom_call.1} parent=5 // pred_region
        %s508 = ssub.s32 %s26, 1
        %p509 = scmp.lt.s32.totalorder %s35, 1
        %s510 = scalar_select %p509, %s35, 1
        %s511 = smul.addr %s510, 8
        %s512 = scalar_lea.vmem %s0, %s511
        %p513 = pneg %p64
        %p514 = pneg %p61
        %p515 = pneg %p85
        %p516 = pneg %p82
        %p517 = pneg %p106
        %p518 = pneg %p103
        %p519 = pneg %p127
        %p520 = pneg %p124
        %p521 = pneg %p148
        %p522 = pneg %p145
        %p523 = pneg %p169
        %p524 = pneg %p166
        %p525 = pneg %p190
        %p526 = pneg %p187
        %p527 = pneg %p211
        %p528 = pneg %p208
        %p529 = pneg %p232
        %p530 = pneg %p229
        %p531 = pneg %p253
        %p532 = pneg %p250
        %p533 = pneg %p274
        %p534 = pneg %p271
        %p535 = pneg %p295
        %p536 = pneg %p292
        %p537 = pneg %p316
        %p538 = pneg %p313
        %p539 = pneg %p337
        %p540 = pneg %p334
        %p541 = pneg %p358
        %p542 = pneg %p355
        %p543 = pneg %p379
        %p544 = pneg %p376
        %p545 = pneg %p400
        %p546 = pneg %p397
        %p547 = pneg %p428
        %p548 = pneg %p425
        %s549 = sand.u32 %s415, 1
        %s550 = scalar_lea.sflag [#allocation6], %s549
        %s551 = sand.u32 %s415, 1
        %s552 = smul.addr %s551, 8
        %s553 = scalar_lea.vmem [#allocation5], %s552
        %p554 = scmp.lt.s32.totalorder %s35, 1
        %s555 = scalar_select %p554, %s35, 1
        %s556 = smul.addr %s555, 8
        %s557 = scalar_lea.vmem %s0, %s556
        %p559 = scmp.eq.s32.totalorder %s36, 0
        // Predicated region
        $region89: #{tpu_custom_call.1} parent=87 // pred_check
          %p560 = pneg %p559
        $region90: #{tpu_custom_call.1} parent=87 // pred_check_branch
          %562 = sbr.rel (%p560) target = $region92
        $region91: #{tpu_custom_call.1} parent=87 // pred_region
          %v563 = vld [vmem:[%s557] sm:$0xff]
          %v564 = vld [vmem:[%s9] sm:$0x1]
          %v565 = vld [vmem:[%s10] sm:$0x1]
          %vm566 = vcmask 261120
          %v567 = vsel %vm566, %v563, 0.0
          %568 = vadd.xlane.f32.xlu0 %v567
          %v569 = vpop.xlane.xlu0 %568
          %v570 = vrcp.pop 32.0
          %v571 = vmul.f32 %v569, %v570
          %v572 = vsub.f32 %v563, %v571
          %v573 = vmul.f32 %v572, %v572
          %v574 = vsel %vm566, %v573, 0.0
          %575 = vadd.xlane.f32.xlu0 %v574
          %v576 = vpop.xlane.xlu0 %575
          %v577 = vmul.f32 %v576, %v570
          %v578 = vadd.f32 %v577, 1e-05
          %v579 = vrsqrt.pop %v578
          %v580 = vmul.f32 %v572, %v579
          %v582 = vlaneseq
          %v583 = vshrl.u32 %v582, 7
          %v584 = vsub.s32 0, %v583
          %v585 = vrot.slane %v564, %v584
          %v587 = vmul.f32 %v580, %v585
          %v589 = vlaneseq
          %v590 = vshrl.u32 %v589, 7
          %v591 = vsub.s32 0, %v590
          %v592 = vrot.slane %v565, %v591
          %v594 = vadd.f32 %v587, %v592
          %v595 = vpack.c.bf16 %v594, %v594
          %vm596 = vcmask 257024
          %597 = vst.msk [vmem:[#allocation2] sm:$0xf] %vm596, %v595
          %v598 = vld [vmem:[%s2] sm:$0xf]
          %v599 = vld [vmem:[%s2 + $0x4] sm:$0xf]
          %v600 = vld [vmem:[%s2 + $0x8] sm:$0xf]
          %v601 = vld [vmem:[%s2 + $0xc] sm:$0xf]
          %v602 = vld [vmem:[%s5] sm:$0x1]
          %v604 = vlaneseq
          %v605 = vshrl.u32 %v604, 7
          %v606 = vsub.s32 0, %v605
          %v607 = vrot.slane %v602, %v606
          %v613 = vunpack.c.l.b16 %v598
          %v614 = vunpack.c.l.b16 %v599
          %v615 = vunpack.c.l.b16 %v600
          %v616 = vunpack.c.l.b16 %v601
          %v617 = vpack.c.b16 %v614, %v613
          %v618 = vpack.c.b16 %v616, %v615
          %v622 = vsel %vm566, %v595, 0
          %624 = vmatprep.subr.bf16.mxu0 0
          %625 = vmatpush1.bf16.msra.mxu0 0
          %626 = vmatprep.subr.bf16.mxu0 0
          %627 = vmatpush1.bf16.msra.mxu0 0
          %628 = vmatprep.subr.bf16.mxu0 0
          %629 = vmatpush1.bf16.msra.mxu0 0
          %630 = vmatprep.subr.bf16.mxu0 0
          %631 = vmatpush1.bf16.msra.mxu0 0
          %632 = vmatprep.subr.bf16.mxu0 0
          %633 = vmatpush1.bf16.msra.mxu0 0
          %634 = vmatprep.subr.bf16.mxu0 0
          %635 = vmatpush1.bf16.msra.mxu0 0
          %636 = vmatprep.subr.bf16.mxu0 0
          %637 = vmatpush1.bf16.msra.mxu0 %v618
          %638 = vmatprep.subr.bf16.mxu0 0
          %639 = vmatpush1.bf16.msra.mxu0 %v617
          %640 = vmatprep.subr.bf16.mxu0 0
          %641 = vmatpush2.bf16.msra.mxu0 0
          %642 = vmatprep.subr.bf16.mxu0 0
          %643 = vmatpush2.bf16.msra.mxu0 0
          %644 = vmatprep.subr.bf16.mxu0 0
          %645 = vmatpush2.bf16.msra.mxu0 0
          %646 = vmatprep.subr.bf16.mxu0 0
          %647 = vmatpush2.bf16.msra.mxu0 0
          %648 = vmatprep.subr.bf16.mxu0 0
          %649 = vmatpush2.bf16.msra.mxu0 0
          %650 = vmatprep.subr.bf16.mxu0 0
          %651 = vmatpush2.bf16.msra.mxu0 0
          %652 = vmatprep.subr.bf16.mxu0 0
          %653 = vmatpush2.bf16.msra.mxu0 0
          %654 = vmatprep.subr.bf16.mxu0 0
          %655 = vmatpush2.bf16.msra.mxu0 0
          %656 = vmatprep.mubr.bf16.mxu0 0
          %657 = vmatmul.mubr.bf16.gmra.mxu0 %v622
          %v658 = vpop.f32.mrf.mxu0
          %v659 = vadd.f32 %v607, %v658
          %v660 = vpop.f32.mrf.mxu0
          %v661 = vpop.f32.mrf.mxu0
          %v662 = vpop.f32.mrf.mxu0
          %663 = vdwg.mxu0
          %v664 = vpack.c.bf16 %v659, %v659
          %vm665 = vcmask 60416
          %666 = vst.msk [vmem:[#allocation3] sm:$0xf] %vm665, %v664
          %v667 = vld [vmem:[%s3] sm:$0xf]
          %v668 = vld [vmem:[%s3 + $0x4] sm:$0xf]
          %v669 = vld [vmem:[%s3 + $0x8] sm:$0xf]
          %v670 = vld [vmem:[%s3 + $0xc] sm:$0xf]
          %v671 = vld [vmem:[%s6] sm:$0x1]
          %v673 = vlaneseq
          %v674 = vshrl.u32 %v673, 7
          %v675 = vsub.s32 0, %v674
          %v676 = vrot.slane %v671, %v675
          %v682 = vunpack.c.l.b16 %v667
          %v683 = vunpack.c.l.b16 %v668
          %v684 = vunpack.c.l.b16 %v669
          %v685 = vunpack.c.l.b16 %v670
          %v686 = vpack.c.b16 %v683, %v682
          %v687 = vpack.c.b16 %v685, %v684
          %690 = vmatprep.subr.bf16.mxu0 0
          %691 = vmatpush1.bf16.msra.mxu0 0
          %692 = vmatprep.subr.bf16.mxu0 0
          %693 = vmatpush1.bf16.msra.mxu0 0
          %694 = vmatprep.subr.bf16.mxu0 0
          %695 = vmatpush1.bf16.msra.mxu0 0
          %696 = vmatprep.subr.bf16.mxu0 0
          %697 = vmatpush1.bf16.msra.mxu0 0
          %698 = vmatprep.subr.bf16.mxu0 0
          %699 = vmatpush1.bf16.msra.mxu0 0
          %700 = vmatprep.subr.bf16.mxu0 0
          %701 = vmatpush1.bf16.msra.mxu0 0
          %702 = vmatprep.subr.bf16.mxu0 0
          %703 = vmatpush1.bf16.msra.mxu0 %v687
          %704 = vmatprep.subr.bf16.mxu0 0
          %705 = vmatpush1.bf16.msra.mxu0 %v686
          %706 = vmatprep.subr.bf16.mxu0 0
          %707 = vmatpush2.bf16.msra.mxu0 0
          %708 = vmatprep.subr.bf16.mxu0 0
          %709 = vmatpush2.bf16.msra.mxu0 0
          %710 = vmatprep.subr.bf16.mxu0 0
          %711 = vmatpush2.bf16.msra.mxu0 0
          %712 = vmatprep.subr.bf16.mxu0 0
          %713 = vmatpush2.bf16.msra.mxu0 0
          %714 = vmatprep.subr.bf16.mxu0 0
          %715 = vmatpush2.bf16.msra.mxu0 0
          %716 = vmatprep.subr.bf16.mxu0 0
          %717 = vmatpush2.bf16.msra.mxu0 0
          %718 = vmatprep.subr.bf16.mxu0 0
          %719 = vmatpush2.bf16.msra.mxu0 0
          %720 = vmatprep.subr.bf16.mxu0 0
          %721 = vmatpush2.bf16.msra.mxu0 0
          %722 = vmatprep.mubr.bf16.mxu0 0
          %723 = vmatmul.mubr.bf16.gmra.mxu0 %v622
          %v724 = vpop.f32.mrf.mxu0
          %v725 = vadd.f32 %v676, %v724
          %v726 = vpop.f32.mrf.mxu0
          %v727 = vpop.f32.mrf.mxu0
          %v728 = vpop.f32.mrf.mxu0
          %729 = vdwg.mxu0
          %v730 = vpack.c.bf16 %v725, %v725
          %731 = vst.msk [vmem:[#allocation4] sm:$0xf] %vm665, %v730
          %s732 = scalar_lea.vmem %s2, 16
          %v733 = vld [vmem:[%s732] sm:$0xf]
          %v734 = vld [vmem:[%s732 + $0x4] sm:$0xf]
          %v735 = vld [vmem:[%s732 + $0x8] sm:$0xf]
          %v736 = vld [vmem:[%s732 + $0xc] sm:$0xf]
          %s737 = scalar_lea.vmem %s5, 1
          %v738 = vld [vmem:[%s737] sm:$0x1]
          %v740 = vlaneseq
          %v741 = vshrl.u32 %v740, 7
          %v742 = vsub.s32 0, %v741
          %v743 = vrot.slane %v738, %v742
          %v749 = vunpack.c.l.b16 %v733
          %v750 = vunpack.c.l.b16 %v734
          %v751 = vunpack.c.l.b16 %v735
          %v752 = vunpack.c.l.b16 %v736
          %v753 = vpack.c.b16 %v750, %v749
          %v754 = vpack.c.b16 %v752, %v751
          %757 = vmatprep.subr.bf16.mxu0 0
          %758 = vmatpush1.bf16.msra.mxu0 0
          %759 = vmatprep.subr.bf16.mxu0 0
          %760 = vmatpush1.bf16.msra.mxu0 0
          %761 = vmatprep.subr.bf16.mxu0 0
          %762 = vmatpush1.bf16.msra.mxu0 0
          %763 = vmatprep.subr.bf16.mxu0 0
          %764 = vmatpush1.bf16.msra.mxu0 0
          %765 = vmatprep.subr.bf16.mxu0 0
          %766 = vmatpush1.bf16.msra.mxu0 0
          %767 = vmatprep.subr.bf16.mxu0 0
          %768 = vmatpush1.bf16.msra.mxu0 0
          %769 = vmatprep.subr.bf16.mxu0 0
          %770 = vmatpush1.bf16.msra.mxu0 %v754
          %771 = vmatprep.subr.bf16.mxu0 0
          %772 = vmatpush1.bf16.msra.mxu0 %v753
          %773 = vmatprep.subr.bf16.mxu0 0
          %774 = vmatpush2.bf16.msra.mxu0 0
          %775 = vmatprep.subr.bf16.mxu0 0
          %776 = vmatpush2.bf16.msra.mxu0 0
          %777 = vmatprep.subr.bf16.mxu0 0
          %778 = vmatpush2.bf16.msra.mxu0 0
          %779 = vmatprep.subr.bf16.mxu0 0
          %780 = vmatpush2.bf16.msra.mxu0 0
          %781 = vmatprep.subr.bf16.mxu0 0
          %782 = vmatpush2.bf16.msra.mxu0 0
          %783 = vmatprep.subr.bf16.mxu0 0
          %784 = vmatpush2.bf16.msra.mxu0 0
          %785 = vmatprep.subr.bf16.mxu0 0
          %786 = vmatpush2.bf16.msra.mxu0 0
          %787 = vmatprep.subr.bf16.mxu0 0
          %788 = vmatpush2.bf16.msra.mxu0 0
          %789 = vmatprep.mubr.bf16.mxu0 0
          %790 = vmatmul.mubr.bf16.gmra.mxu0 %v622
          %v791 = vpop.f32.mrf.mxu0
          %v792 = vadd.f32 %v743, %v791
          %v793 = vpop.f32.mrf.mxu0
          %v794 = vpop.f32.mrf.mxu0
          %v795 = vpop.f32.mrf.mxu0
          %796 = vdwg.mxu0
          %v797 = vpack.c.bf16 %v792, %v792
          %s798 = scalar_lea.vmem [#allocation3], 4
          %799 = vst.msk [vmem:[%s798] sm:$0xf] %vm665, %v797
          %s800 = scalar_lea.vmem %s3, 16
          %v801 = vld [vmem:[%s800] sm:$0xf]
          %v802 = vld [vmem:[%s800 + $0x4] sm:$0xf]
          %v803 = vld [vmem:[%s800 + $0x8] sm:$0xf]
          %v804 = vld [vmem:[%s800 + $0xc] sm:$0xf]
          %s805 = scalar_lea.vmem %s6, 1
          %v806 = vld [vmem:[%s805] sm:$0x1]
          %v808 = vlaneseq
          %v809 = vshrl.u32 %v808, 7
          %v810 = vsub.s32 0, %v809
          %v811 = vrot.slane %v806, %v810
          %v817 = vunpack.c.l.b16 %v801
          %v818 = vunpack.c.l.b16 %v802
          %v819 = vunpack.c.l.b16 %v803
          %v820 = vunpack.c.l.b16 %v804
          %v821 = vpack.c.b16 %v818, %v817
          %v822 = vpack.c.b16 %v820, %v819
          %825 = vmatprep.subr.bf16.mxu0 0
          %826 = vmatpush1.bf16.msra.mxu0 0
          %827 = vmatprep.subr.bf16.mxu0 0
          %828 = vmatpush1.bf16.msra.mxu0 0
          %829 = vmatprep.subr.bf16.mxu0 0
          %830 = vmatpush1.bf16.msra.mxu0 0
          %831 = vmatprep.subr.bf16.mxu0 0
          %832 = vmatpush1.bf16.msra.mxu0 0
          %833 = vmatprep.subr.bf16.mxu0 0
          %834 = vmatpush1.bf16.msra.mxu0 0
          %835 = vmatprep.subr.bf16.mxu0 0
          %836 = vmatpush1.bf16.msra.mxu0 0
          %837 = vmatprep.subr.bf16.mxu0 0
          %838 = vmatpush1.bf16.msra.mxu0 %v822
          %839 = vmatprep.subr.bf16.mxu0 0
          %840 = vmatpush1.bf16.msra.mxu0 %v821
          %841 = vmatprep.subr.bf16.mxu0 0
          %842 = vmatpush2.bf16.msra.mxu0 0
          %843 = vmatprep.subr.bf16.mxu0 0
          %844 = vmatpush2.bf16.msra.mxu0 0
          %845 = vmatprep.subr.bf16.mxu0 0
          %846 = vmatpush2.bf16.msra.mxu0 0
          %847 = vmatprep.subr.bf16.mxu0 0
          %848 = vmatpush2.bf16.msra.mxu0 0
          %849 = vmatprep.subr.bf16.mxu0 0
          %850 = vmatpush2.bf16.msra.mxu0 0
          %851 = vmatprep.subr.bf16.mxu0 0
          %852 = vmatpush2.bf16.msra.mxu0 0
          %853 = vmatprep.subr.bf16.mxu0 0
          %854 = vmatpush2.bf16.msra.mxu0 0
          %855 = vmatprep.subr.bf16.mxu0 0
          %856 = vmatpush2.bf16.msra.mxu0 0
          %857 = vmatprep.mubr.bf16.mxu0 0
          %858 = vmatmul.mubr.bf16.gmra.mxu0 %v622
          %v859 = vpop.f32.mrf.mxu0
          %v860 = vadd.f32 %v811, %v859
          %v861 = vpop.f32.mrf.mxu0
          %v862 = vpop.f32.mrf.mxu0
          %v863 = vpop.f32.mrf.mxu0
          %864 = vdwg.mxu0
          %v865 = vpack.c.bf16 %v860, %v860
          %s866 = scalar_lea.vmem [#allocation4], 4
          %867 = vst.msk [vmem:[%s866] sm:$0xf] %vm665, %v865
          %s868 = scalar_lea.vmem %s2, 32
          %v869 = vld [vmem:[%s868] sm:$0xf]
          %v870 = vld [vmem:[%s868 + $0x4] sm:$0xf]
          %v871 = vld [vmem:[%s868 + $0x8] sm:$0xf]
          %v872 = vld [vmem:[%s868 + $0xc] sm:$0xf]
          %s873 = scalar_lea.vmem %s5, 2
          %v874 = vld [vmem:[%s873] sm:$0x1]
          %v876 = vlaneseq
          %v877 = vshrl.u32 %v876, 7
          %v878 = vsub.s32 0, %v877
          %v879 = vrot.slane %v874, %v878
          %v885 = vunpack.c.l.b16 %v869
          %v886 = vunpack.c.l.b16 %v870
          %v887 = vunpack.c.l.b16 %v871
          %v888 = vunpack.c.l.b16 %v872
          %v889 = vpack.c.b16 %v886, %v885
          %v890 = vpack.c.b16 %v888, %v887
          %893 = vmatprep.subr.bf16.mxu0 0
          %894 = vmatpush1.bf16.msra.mxu0 0
          %895 = vmatprep.subr.bf16.mxu0 0
          %896 = vmatpush1.bf16.msra.mxu0 0
          %897 = vmatprep.subr.bf16.mxu0 0
          %898 = vmatpush1.bf16.msra.mxu0 0
          %899 = vmatprep.subr.bf16.mxu0 0
          %900 = vmatpush1.bf16.msra.mxu0 0
          %901 = vmatprep.subr.bf16.mxu0 0
          %902 = vmatpush1.bf16.msra.mxu0 0
          %903 = vmatprep.subr.bf16.mxu0 0
          %904 = vmatpush1.bf16.msra.mxu0 0
          %905 = vmatprep.subr.bf16.mxu0 0
          %906 = vmatpush1.bf16.msra.mxu0 %v890
          %907 = vmatprep.subr.bf16.mxu0 0
          %908 = vmatpush1.bf16.msra.mxu0 %v889
          %909 = vmatprep.subr.bf16.mxu0 0
          %910 = vmatpush2.bf16.msra.mxu0 0
          %911 = vmatprep.subr.bf16.mxu0 0
          %912 = vmatpush2.bf16.msra.mxu0 0
          %913 = vmatprep.subr.bf16.mxu0 0
          %914 = vmatpush2.bf16.msra.mxu0 0
          %915 = vmatprep.subr.bf16.mxu0 0
          %916 = vmatpush2.bf16.msra.mxu0 0
          %917 = vmatprep.subr.bf16.mxu0 0
          %918 = vmatpush2.bf16.msra.mxu0 0
          %919 = vmatprep.subr.bf16.mxu0 0
          %920 = vmatpush2.bf16.msra.mxu0 0
          %921 = vmatprep.subr.bf16.mxu0 0
          %922 = vmatpush2.bf16.msra.mxu0 0
          %923 = vmatprep.subr.bf16.mxu0 0
          %924 = vmatpush2.bf16.msra.mxu0 0
          %925 = vmatprep.mubr.bf16.mxu0 0
          %926 = vmatmul.mubr.bf16.gmra.mxu0 %v622
          %v927 = vpop.f32.mrf.mxu0
          %v928 = vadd.f32 %v879, %v927
          %v929 = vpop.f32.mrf.mxu0
          %v930 = vpop.f32.mrf.mxu0
          %v931 = vpop.f32.mrf.mxu0
          %932 = vdwg.mxu0
          %v933 = vpack.c.bf16 %v928, %v928
          %s934 = scalar_lea.vmem [#allocation3], 8
          %935 = vst.msk [vmem:[%s934] sm:$0xf] %vm665, %v933
          %s936 = scalar_lea.vmem %s3, 32
          %v937 = vld [vmem:[%s936] sm:$0xf]
          %v938 = vld [vmem:[%s936 + $0x4] sm:$0xf]
          %v939 = vld [vmem:[%s936 + $0x8] sm:$0xf]
          %v940 = vld [vmem:[%s936 + $0xc] sm:$0xf]
          %s941 = scalar_lea.vmem %s6, 2
          %v942 = vld [vmem:[%s941] sm:$0x1]
          %v944 = vlaneseq
          %v945 = vshrl.u32 %v944, 7
          %v946 = vsub.s32 0, %v945
          %v947 = vrot.slane %v942, %v946
          %v953 = vunpack.c.l.b16 %v937
          %v954 = vunpack.c.l.b16 %v938
          %v955 = vunpack.c.l.b16 %v939
          %v956 = vunpack.c.l.b16 %v940
          %v957 = vpack.c.b16 %v954, %v953
          %v958 = vpack.c.b16 %v956, %v955
          %961 = vmatprep.subr.bf16.mxu0 0
          %962 = vmatpush1.bf16.msra.mxu0 0
          %963 = vmatprep.subr.bf16.mxu0 0
          %964 = vmatpush1.bf16.msra.mxu0 0
          %965 = vmatprep.subr.bf16.mxu0 0
          %966 = vmatpush1.bf16.msra.mxu0 0
          %967 = vmatprep.subr.bf16.mxu0 0
          %968 = vmatpush1.bf16.msra.mxu0 0
          %969 = vmatprep.subr.bf16.mxu0 0
          %970 = vmatpush1.bf16.msra.mxu0 0
          %971 = vmatprep.subr.bf16.mxu0 0
          %972 = vmatpush1.bf16.msra.mxu0 0
          %973 = vmatprep.subr.bf16.mxu0 0
          %974 = vmatpush1.bf16.msra.mxu0 %v958
          %975 = vmatprep.subr.bf16.mxu0 0
          %976 = vmatpush1.bf16.msra.mxu0 %v957
          %977 = vmatprep.subr.bf16.mxu0 0
          %978 = vmatpush2.bf16.msra.mxu0 0
          %979 = vmatprep.subr.bf16.mxu0 0
          %980 = vmatpush2.bf16.msra.mxu0 0
          %981 = vmatprep.subr.bf16.mxu0 0
          %982 = vmatpush2.bf16.msra.mxu0 0
          %983 = vmatprep.subr.bf16.mxu0 0
          %984 = vmatpush2.bf16.msra.mxu0 0
          %985 = vmatprep.subr.bf16.mxu0 0
          %986 = vmatpush2.bf16.msra.mxu0 0
          %987 = vmatprep.subr.bf16.mxu0 0
          %988 = vmatpush2.bf16.msra.mxu0 0
          %989 = vmatprep.subr.bf16.mxu0 0
          %990 = vmatpush2.bf16.msra.mxu0 0
          %991 = vmatprep.subr.bf16.mxu0 0
          %992 = vmatpush2.bf16.msra.mxu0 0
          %993 = vmatprep.mubr.bf16.mxu0 0
          %994 = vmatmul.mubr.bf16.gmra.mxu0 %v622
          %v995 = vpop.f32.mrf.mxu0
          %v996 = vadd.f32 %v947, %v995
          %v997 = vpop.f32.mrf.mxu0
          %v998 = vpop.f32.mrf.mxu0
          %v999 = vpop.f32.mrf.mxu0
          %1000 = vdwg.mxu0
          %v1001 = vpack.c.bf16 %v996, %v996
          %s1002 = scalar_lea.vmem [#allocation4], 8
          %1003 = vst.msk [vmem:[%s1002] sm:$0xf] %vm665, %v1001
          %s1004 = scalar_lea.vmem %s2, 48
          %v1005 = vld [vmem:[%s1004] sm:$0xf]
          %v1006 = vld [vmem:[%s1004 + $0x4] sm:$0xf]
          %v1007 = vld [vmem:[%s1004 + $0x8] sm:$0xf]
          %v1008 = vld [vmem:[%s1004 + $0xc] sm:$0xf]
          %s1009 = scalar_lea.vmem %s5, 3
          %v1010 = vld [vmem:[%s1009] sm:$0x1]
          %v1012 = vlaneseq
          %v1013 = vshrl.u32 %v1012, 7
          %v1014 = vsub.s32 0, %v1013
          %v1015 = vrot.slane %v1010, %v1014
          %v1021 = vunpack.c.l.b16 %v1005
          %v1022 = vunpack.c.l.b16 %v1006
          %v1023 = vunpack.c.l.b16 %v1007
          %v1024 = vunpack.c.l.b16 %v1008
          %v1025 = vpack.c.b16 %v1022, %v1021
          %v1026 = vpack.c.b16 %v1024, %v1023
          %1029 = vmatprep.subr.bf16.mxu0 0
          %1030 = vmatpush1.bf16.msra.mxu0 0
          %1031 = vmatprep.subr.bf16.mxu0 0
          %1032 = vmatpush1.bf16.msra.mxu0 0
          %1033 = vmatprep.subr.bf16.mxu0 0
          %1034 = vmatpush1.bf16.msra.mxu0 0
          %1035 = vmatprep.subr.bf16.mxu0 0
          %1036 = vmatpush1.bf16.msra.mxu0 0
          %1037 = vmatprep.subr.bf16.mxu0 0
          %1038 = vmatpush1.bf16.msra.mxu0 0
          %1039 = vmatprep.subr.bf16.mxu0 0
          %1040 = vmatpush1.bf16.msra.mxu0 0
          %1041 = vmatprep.subr.bf16.mxu0 0
          %1042 = vmatpush1.bf16.msra.mxu0 %v1026
          %1043 = vmatprep.subr.bf16.mxu0 0
          %1044 = vmatpush1.bf16.msra.mxu0 %v1025
          %1045 = vmatprep.subr.bf16.mxu0 0
          %1046 = vmatpush2.bf16.msra.mxu0 0
          %1047 = vmatprep.subr.bf16.mxu0 0
          %1048 = vmatpush2.bf16.msra.mxu0 0
          %1049 = vmatprep.subr.bf16.mxu0 0
          %1050 = vmatpush2.bf16.msra.mxu0 0
          %1051 = vmatprep.subr.bf16.mxu0 0
          %1052 = vmatpush2.bf16.msra.mxu0 0
          %1053 = vmatprep.subr.bf16.mxu0 0
          %1054 = vmatpush2.bf16.msra.mxu0 0
          %1055 = vmatprep.subr.bf16.mxu0 0
          %1056 = vmatpush2.bf16.msra.mxu0 0
          %1057 = vmatprep.subr.bf16.mxu0 0
          %1058 = vmatpush2.bf16.msra.mxu0 0
          %1059 = vmatprep.subr.bf16.mxu0 0
          %1060 = vmatpush2.bf16.msra.mxu0 0
          %1061 = vmatprep.mubr.bf16.mxu0 0
          %1062 = vmatmul.mubr.bf16.gmra.mxu0 %v622
          %v1063 = vpop.f32.mrf.mxu0
          %v1064 = vadd.f32 %v1015, %v1063
          %v1065 = vpop.f32.mrf.mxu0
          %v1066 = vpop.f32.mrf.mxu0
          %v1067 = vpop.f32.mrf.mxu0
          %1068 = vdwg.mxu0
          %v1069 = vpack.c.bf16 %v1064, %v1064
          %s1070 = scalar_lea.vmem [#allocation3], 12
          %1071 = vst.msk [vmem:[%s1070] sm:$0xf] %vm665, %v1069
          %s1072 = scalar_lea.vmem %s3, 48
          %v1073 = vld [vmem:[%s1072] sm:$0xf]
          %v1074 = vld [vmem:[%s1072 + $0x4] sm:$0xf]
          %v1075 = vld [vmem:[%s1072 + $0x8] sm:$0xf]
          %v1076 = vld [vmem:[%s1072 + $0xc] sm:$0xf]
          %s1077 = scalar_lea.vmem %s6, 3
          %v1078 = vld [vmem:[%s1077] sm:$0x1]
          %v1080 = vlaneseq
          %v1081 = vshrl.u32 %v1080, 7
          %v1082 = vsub.s32 0, %v1081
          %v1083 = vrot.slane %v1078, %v1082
          %v1089 = vunpack.c.l.b16 %v1073
          %v1090 = vunpack.c.l.b16 %v1074
          %v1091 = vunpack.c.l.b16 %v1075
          %v1092 = vunpack.c.l.b16 %v1076
          %v1093 = vpack.c.b16 %v1090, %v1089
          %v1094 = vpack.c.b16 %v1092, %v1091
          %1097 = vmatprep.subr.bf16.mxu0 0
          %1098 = vmatpush1.bf16.msra.mxu0 0
          %1099 = vmatprep.subr.bf16.mxu0 0
          %1100 = vmatpush1.bf16.msra.mxu0 0
          %1101 = vmatprep.subr.bf16.mxu0 0
          %1102 = vmatpush1.bf16.msra.mxu0 0
          %1103 = vmatprep.subr.bf16.mxu0 0
          %1104 = vmatpush1.bf16.msra.mxu0 0
          %1105 = vmatprep.subr.bf16.mxu0 0
          %1106 = vmatpush1.bf16.msra.mxu0 0
          %1107 = vmatprep.subr.bf16.mxu0 0
          %1108 = vmatpush1.bf16.msra.mxu0 0
          %1109 = vmatprep.subr.bf16.mxu0 0
          %1110 = vmatpush1.bf16.msra.mxu0 %v1094
          %1111 = vmatprep.subr.bf16.mxu0 0
          %1112 = vmatpush1.bf16.msra.mxu0 %v1093
          %1113 = vmatprep.subr.bf16.mxu0 0
          %1114 = vmatpush2.bf16.msra.mxu0 0
          %1115 = vmatprep.subr.bf16.mxu0 0
          %1116 = vmatpush2.bf16.msra.mxu0 0
          %1117 = vmatprep.subr.bf16.mxu0 0
          %1118 = vmatpush2.bf16.msra.mxu0 0
          %1119 = vmatprep.subr.bf16.mxu0 0
          %1120 = vmatpush2.bf16.msra.mxu0 0
          %1121 = vmatprep.subr.bf16.mxu0 0
          %1122 = vmatpush2.bf16.msra.mxu0 0
          %1123 = vmatprep.subr.bf16.mxu0 0
          %1124 = vmatpush2.bf16.msra.mxu0 0
          %1125 = vmatprep.subr.bf16.mxu0 0
          %1126 = vmatpush2.bf16.msra.mxu0 0
          %1127 = vmatprep.subr.bf16.mxu0 0
          %1128 = vmatpush2.bf16.msra.mxu0 0
          %1129 = vmatprep.mubr.bf16.mxu0 0
          %1130 = vmatmul.mubr.bf16.gmra.mxu0 %v622
          %v1131 = vpop.f32.mrf.mxu0
          %v1132 = vadd.f32 %v1083, %v1131
          %v1133 = vpop.f32.mrf.mxu0
          %v1134 = vpop.f32.mrf.mxu0
          %v1135 = vpop.f32.mrf.mxu0
          %1136 = vdwg.mxu0
          %v1137 = vpack.c.bf16 %v1132, %v1132
          %s1138 = scalar_lea.vmem [#allocation4], 12
          %1139 = vst.msk [vmem:[%s1138] sm:$0xf] %vm665, %v1137
        $region92: #{tpu_custom_call.1} parent=87 // pred_fallthru
          _
        %s1140 = smul.u32 %s36, 8
        %s1141 = sshra.s32 %s1140, 3
        %s1142 = sand.u32 %s1140, 7
        %s1143 = smul.addr %s1141, 4
        %s1144 = scalar_lea.vmem [#allocation2], %s1143
        %v1145 = vld [vmem:[%s1144] sm:$0xf]
        %v1146 = vld [vmem:[%s1] sm:$0xf]
        %v1147 = vld [vmem:[%s1 + $0x4] sm:$0xf]
        %v1148 = vld [vmem:[%s1 + $0x8] sm:$0xf]
        %v1149 = vld [vmem:[%s1 + $0xc] sm:$0xf]
        %v1150 = vld [vmem:[%s4] sm:$0x1]
        %v1152 = vlaneseq
        %v1153 = vshrl.u32 %v1152, 7
        %v1154 = vsub.s32 0, %v1153
        %v1155 = vrot.slane %v1150, %v1154
        %v1161 = vunpack.c.l.b16 %v1146
        %v1162 = vunpack.c.l.b16 %v1147
        %v1163 = vunpack.c.l.b16 %v1148
        %v1164 = vunpack.c.l.b16 %v1149
        %v1165 = vpack.c.b16 %v1162, %v1161
        %v1166 = vpack.c.b16 %v1164, %v1163
        %vm1169 = vcmask 261120
        %v1171 = vsel %vm1169, %v1145, 0
        %1173 = vmatprep.subr.bf16.mxu0 0
        %1174 = vmatpush1.bf16.msra.mxu0 0
        %1175 = vmatprep.subr.bf16.mxu0 0
        %1176 = vmatpush1.bf16.msra.mxu0 0
        %1177 = vmatprep.subr.bf16.mxu0 0
        %1178 = vmatpush1.bf16.msra.mxu0 0
        %1179 = vmatprep.subr.bf16.mxu0 0
        %1180 = vmatpush1.bf16.msra.mxu0 0
        %1181 = vmatprep.subr.bf16.mxu0 0
        %1182 = vmatpush1.bf16.msra.mxu0 0
        %1183 = vmatprep.subr.bf16.mxu0 0
        %1184 = vmatpush1.bf16.msra.mxu0 0
        %1185 = vmatprep.subr.bf16.mxu0 0
        %1186 = vmatpush1.bf16.msra.mxu0 %v1166
        %1187 = vmatprep.subr.bf16.mxu0 0
        %1188 = vmatpush1.bf16.msra.mxu0 %v1165
        %1189 = vmatprep.subr.bf16.mxu0 0
        %1190 = vmatpush2.bf16.msra.mxu0 0
        %1191 = vmatprep.subr.bf16.mxu0 0
        %1192 = vmatpush2.bf16.msra.mxu0 0
        %1193 = vmatprep.subr.bf16.mxu0 0
        %1194 = vmatpush2.bf16.msra.mxu0 0
        %1195 = vmatprep.subr.bf16.mxu0 0
        %1196 = vmatpush2.bf16.msra.mxu0 0
        %1197 = vmatprep.subr.bf16.mxu0 0
        %1198 = vmatpush2.bf16.msra.mxu0 0
        %1199 = vmatprep.subr.bf16.mxu0 0
        %1200 = vmatpush2.bf16.msra.mxu0 0
        %1201 = vmatprep.subr.bf16.mxu0 0
        %1202 = vmatpush2.bf16.msra.mxu0 0
        %1203 = vmatprep.subr.bf16.mxu0 0
        %1204 = vmatpush2.bf16.msra.mxu0 0
        %1205 = vmatprep.mubr.bf16.mxu0 0
        %1206 = vmatmul.mubr.bf16.gmra.mxu0 %v1171
        %v1207 = vpop.f32.mrf.mxu0
        %v1208 = vadd.f32 %v1155, %v1207
        %v1209 = vpop.f32.mrf.mxu0
        %v1210 = vpop.f32.mrf.mxu0
        %v1211 = vpop.f32.mrf.mxu0
        %1212 = vdwg.mxu0
        %v1213 = vmul.f32 %v1208, 0.35355338
        %v1214 = vpack.c.bf16 %v1213, %v1213
        %s1215 = scalar_lea.vmem %s1, 16
        %v1216 = vld [vmem:[%s1215] sm:$0xf]
        %v1217 = vld [vmem:[%s1215 + $0x4] sm:$0xf]
        %v1218 = vld [vmem:[%s1215 + $0x8] sm:$0xf]
        %v1219 = vld [vmem:[%s1215 + $0xc] sm:$0xf]
        %s1220 = scalar_lea.vmem %s4, 1
        %v1221 = vld [vmem:[%s1220] sm:$0x1]
        %v1223 = vlaneseq
        %v1224 = vshrl.u32 %v1223, 7
        %v1225 = vsub.s32 0, %v1224
        %v1226 = vrot.slane %v1221, %v1225
        %v1232 = vunpack.c.l.b16 %v1216
        %v1233 = vunpack.c.l.b16 %v1217
        %v1234 = vunpack.c.l.b16 %v1218
        %v1235 = vunpack.c.l.b16 %v1219
        %v1236 = vpack.c.b16 %v1233, %v1232
        %v1237 = vpack.c.b16 %v1235, %v1234
        %1240 = vmatprep.subr.bf16.mxu0 0
        %1241 = vmatpush1.bf16.msra.mxu0 0
        %1242 = vmatprep.subr.bf16.mxu0 0
        %1243 = vmatpush1.bf16.msra.mxu0 0
        %1244 = vmatprep.subr.bf16.mxu0 0
        %1245 = vmatpush1.bf16.msra.mxu0 0
        %1246 = vmatprep.subr.bf16.mxu0 0
        %1247 = vmatpush1.bf16.msra.mxu0 0
        %1248 = vmatprep.subr.bf16.mxu0 0
        %1249 = vmatpush1.bf16.msra.mxu0 0
        %1250 = vmatprep.subr.bf16.mxu0 0
        %1251 = vmatpush1.bf16.msra.mxu0 0
        %1252 = vmatprep.subr.bf16.mxu0 0
        %1253 = vmatpush1.bf16.msra.mxu0 %v1237
        %1254 = vmatprep.subr.bf16.mxu0 0
        %1255 = vmatpush1.bf16.msra.mxu0 %v1236
        %1256 = vmatprep.subr.bf16.mxu0 0
        %1257 = vmatpush2.bf16.msra.mxu0 0
        %1258 = vmatprep.subr.bf16.mxu0 0
        %1259 = vmatpush2.bf16.msra.mxu0 0
        %1260 = vmatprep.subr.bf16.mxu0 0
        %1261 = vmatpush2.bf16.msra.mxu0 0
        %1262 = vmatprep.subr.bf16.mxu0 0
        %1263 = vmatpush2.bf16.msra.mxu0 0
        %1264 = vmatprep.subr.bf16.mxu0 0
        %1265 = vmatpush2.bf16.msra.mxu0 0
        %1266 = vmatprep.subr.bf16.mxu0 0
        %1267 = vmatpush2.bf16.msra.mxu0 0
        %1268 = vmatprep.subr.bf16.mxu0 0
        %1269 = vmatpush2.bf16.msra.mxu0 0
        %1270 = vmatprep.subr.bf16.mxu0 0
        %1271 = vmatpush2.bf16.msra.mxu0 0
        %1272 = vmatprep.mubr.bf16.mxu0 0
        %1273 = vmatmul.mubr.bf16.gmra.mxu0 %v1171
        %v1274 = vpop.f32.mrf.mxu0
        %v1275 = vadd.f32 %v1226, %v1274
        %v1276 = vpop.f32.mrf.mxu0
        %v1277 = vpop.f32.mrf.mxu0
        %v1278 = vpop.f32.mrf.mxu0
        %1279 = vdwg.mxu0
        %v1280 = vmul.f32 %v1275, 0.35355338
        %v1281 = vpack.c.bf16 %v1280, %v1280
        %s1282 = scalar_lea.vmem %s1, 32
        %v1283 = vld [vmem:[%s1282] sm:$0xf]
        %v1284 = vld [vmem:[%s1282 + $0x4] sm:$0xf]
        %v1285 = vld [vmem:[%s1282 + $0x8] sm:$0xf]
        %v1286 = vld [vmem:[%s1282 + $0xc] sm:$0xf]
        %s1287 = scalar_lea.vmem %s4, 2
        %v1288 = vld [vmem:[%s1287] sm:$0x1]
        %v1290 = vlaneseq
        %v1291 = vshrl.u32 %v1290, 7
        %v1292 = vsub.s32 0, %v1291
        %v1293 = vrot.slane %v1288, %v1292
        %v1299 = vunpack.c.l.b16 %v1283
        %v1300 = vunpack.c.l.b16 %v1284
        %v1301 = vunpack.c.l.b16 %v1285
        %v1302 = vunpack.c.l.b16 %v1286
        %v1303 = vpack.c.b16 %v1300, %v1299
        %v1304 = vpack.c.b16 %v1302, %v1301
        %1307 = vmatprep.subr.bf16.mxu0 0
        %1308 = vmatpush1.bf16.msra.mxu0 0
        %1309 = vmatprep.subr.bf16.mxu0 0
        %1310 = vmatpush1.bf16.msra.mxu0 0
        %1311 = vmatprep.subr.bf16.mxu0 0
        %1312 = vmatpush1.bf16.msra.mxu0 0
        %1313 = vmatprep.subr.bf16.mxu0 0
        %1314 = vmatpush1.bf16.msra.mxu0 0
        %1315 = vmatprep.subr.bf16.mxu0 0
        %1316 = vmatpush1.bf16.msra.mxu0 0
        %1317 = vmatprep.subr.bf16.mxu0 0
        %1318 = vmatpush1.bf16.msra.mxu0 0
        %1319 = vmatprep.subr.bf16.mxu0 0
        %1320 = vmatpush1.bf16.msra.mxu0 %v1304
        %1321 = vmatprep.subr.bf16.mxu0 0
        %1322 = vmatpush1.bf16.msra.mxu0 %v1303
        %1323 = vmatprep.subr.bf16.mxu0 0
        %1324 = vmatpush2.bf16.msra.mxu0 0
        %1325 = vmatprep.subr.bf16.mxu0 0
        %1326 = vmatpush2.bf16.msra.mxu0 0
        %1327 = vmatprep.subr.bf16.mxu0 0
        %1328 = vmatpush2.bf16.msra.mxu0 0
        %1329 = vmatprep.subr.bf16.mxu0 0
        %1330 = vmatpush2.bf16.msra.mxu0 0
        %1331 = vmatprep.subr.bf16.mxu0 0
        %1332 = vmatpush2.bf16.msra.mxu0 0
        %1333 = vmatprep.subr.bf16.mxu0 0
        %1334 = vmatpush2.bf16.msra.mxu0 0
        %1335 = vmatprep.subr.bf16.mxu0 0
        %1336 = vmatpush2.bf16.msra.mxu0 0
        %1337 = vmatprep.subr.bf16.mxu0 0
        %1338 = vmatpush2.bf16.msra.mxu0 0
        %1339 = vmatprep.mubr.bf16.mxu0 0
        %1340 = vmatmul.mubr.bf16.gmra.mxu0 %v1171
        %v1341 = vpop.f32.mrf.mxu0
        %v1342 = vadd.f32 %v1293, %v1341
        %v1343 = vpop.f32.mrf.mxu0
        %v1344 = vpop.f32.mrf.mxu0
        %v1345 = vpop.f32.mrf.mxu0
        %1346 = vdwg.mxu0
        %v1347 = vmul.f32 %v1342, 0.35355338
        %v1348 = vpack.c.bf16 %v1347, %v1347
        %s1349 = scalar_lea.vmem %s1, 48
        %v1350 = vld [vmem:[%s1349] sm:$0xf]
        %v1351 = vld [vmem:[%s1349 + $0x4] sm:$0xf]
        %v1352 = vld [vmem:[%s1349 + $0x8] sm:$0xf]
        %v1353 = vld [vmem:[%s1349 + $0xc] sm:$0xf]
        %s1354 = scalar_lea.vmem %s4, 3
        %v1355 = vld [vmem:[%s1354] sm:$0x1]
        %v1357 = vlaneseq
        %v1358 = vshrl.u32 %v1357, 7
        %v1359 = vsub.s32 0, %v1358
        %v1360 = vrot.slane %v1355, %v1359
        %v1366 = vunpack.c.l.b16 %v1350
        %v1367 = vunpack.c.l.b16 %v1351
        %v1368 = vunpack.c.l.b16 %v1352
        %v1369 = vunpack.c.l.b16 %v1353
        %v1370 = vpack.c.b16 %v1367, %v1366
        %v1371 = vpack.c.b16 %v1369, %v1368
        %1374 = vmatprep.subr.bf16.mxu0 0
        %1375 = vmatpush1.bf16.msra.mxu0 0
        %1376 = vmatprep.subr.bf16.mxu0 0
        %1377 = vmatpush1.bf16.msra.mxu0 0
        %1378 = vmatprep.subr.bf16.mxu0 0
        %1379 = vmatpush1.bf16.msra.mxu0 0
        %1380 = vmatprep.subr.bf16.mxu0 0
        %1381 = vmatpush1.bf16.msra.mxu0 0
        %1382 = vmatprep.subr.bf16.mxu0 0
        %1383 = vmatpush1.bf16.msra.mxu0 0
        %1384 = vmatprep.subr.bf16.mxu0 0
        %1385 = vmatpush1.bf16.msra.mxu0 0
        %1386 = vmatprep.subr.bf16.mxu0 0
        %1387 = vmatpush1.bf16.msra.mxu0 %v1371
        %1388 = vmatprep.subr.bf16.mxu0 0
        %1389 = vmatpush1.bf16.msra.mxu0 %v1370
        %1390 = vmatprep.subr.bf16.mxu0 0
        %1391 = vmatpush2.bf16.msra.mxu0 0
        %1392 = vmatprep.subr.bf16.mxu0 0
        %1393 = vmatpush2.bf16.msra.mxu0 0
        %1394 = vmatprep.subr.bf16.mxu0 0
        %1395 = vmatpush2.bf16.msra.mxu0 0
        %1396 = vmatprep.subr.bf16.mxu0 0
        %1397 = vmatpush2.bf16.msra.mxu0 0
        %1398 = vmatprep.subr.bf16.mxu0 0
        %1399 = vmatpush2.bf16.msra.mxu0 0
        %1400 = vmatprep.subr.bf16.mxu0 0
        %1401 = vmatpush2.bf16.msra.mxu0 0
        %1402 = vmatprep.subr.bf16.mxu0 0
        %1403 = vmatpush2.bf16.msra.mxu0 0
        %1404 = vmatprep.subr.bf16.mxu0 0
        %1405 = vmatpush2.bf16.msra.mxu0 0
        %1406 = vmatprep.mubr.bf16.mxu0 0
        %1407 = vmatmul.mubr.bf16.gmra.mxu0 %v1171
        %v1408 = vpop.f32.mrf.mxu0
        %v1409 = vadd.f32 %v1360, %v1408
        %v1410 = vpop.f32.mrf.mxu0
        %v1411 = vpop.f32.mrf.mxu0
        %v1412 = vpop.f32.mrf.mxu0
        %1413 = vdwg.mxu0
        %v1414 = vmul.f32 %v1409, 0.35355338
        %v1415 = vpack.c.bf16 %v1414, %v1414
        %v1416 = vld [vmem:[#allocation3] sm:$0xf]
        %v1417 = vld [vmem:[#allocation3 + $0x4] sm:$0xf]
        %v1418 = vld [vmem:[#allocation3 + $0x8] sm:$0xf]
        %v1419 = vld [vmem:[#allocation3 + $0xc] sm:$0xf]
        %v1420 = vld [vmem:[#allocation4] sm:$0xf]
        %v1421 = vld [vmem:[#allocation4 + $0x4] sm:$0xf]
        %v1422 = vld [vmem:[#allocation4 + $0x8] sm:$0xf]
        %v1423 = vld [vmem:[#allocation4 + $0xc] sm:$0xf]
        %vm1424 = vcmask 64512
        %v1426 = vsel %vm1424, %v1214, 0
        %v1429 = vsel %vm1424, %v1416, 0
        %1431 = vmatprep.subr.bf16.mxu0 0
        %1432 = vmatpush1.bf16.xpose.msra.mxu0 0
        %1433 = vmatprep.subr.bf16.mxu0 0
        %1434 = vmatpush1.bf16.xpose.msra.mxu0 0
        %1435 = vmatprep.subr.bf16.mxu0 0
        %1436 = vmatpush1.bf16.xpose.msra.mxu0 0
        %1437 = vmatprep.subr.bf16.mxu0 0
        %1438 = vmatpush1.bf16.xpose.msra.mxu0 0
        %1439 = vmatprep.subr.bf16.mxu0 0
        %1440 = vmatpush1.bf16.xpose.msra.mxu0 0
        %1441 = vmatprep.subr.bf16.mxu0 0
        %1442 = vmatpush1.bf16.xpose.msra.mxu0 0
        %1443 = vmatprep.subr.bf16.mxu0 0
        %1444 = vmatpush1.bf16.xpose.msra.mxu0 0
        %1445 = vmatprep.subr.bf16.mxu0 0
        %1446 = vmatpush1.bf16.xpose.msra.mxu0 %v1429
        %1447 = vmatprep.subr.bf16.mxu0 0
        %1448 = vmatpush2.bf16.xpose.msra.mxu0 0
        %1449 = vmatprep.subr.bf16.mxu0 0
        %1450 = vmatpush2.bf16.xpose.msra.mxu0 0
        %1451 = vmatprep.subr.bf16.mxu0 0
        %1452 = vmatpush2.bf16.xpose.msra.mxu0 0
        %1453 = vmatprep.subr.bf16.mxu0 0
        %1454 = vmatpush2.bf16.xpose.msra.mxu0 0
        %1455 = vmatprep.subr.bf16.mxu0 0
        %1456 = vmatpush2.bf16.xpose.msra.mxu0 0
        %1457 = vmatprep.subr.bf16.mxu0 0
        %1458 = vmatpush2.bf16.xpose.msra.mxu0 0
        %1459 = vmatprep.subr.bf16.mxu0 0
        %1460 = vmatpush2.bf16.xpose.msra.mxu0 0
        %1461 = vmatprep.subr.bf16.mxu0 0
        %1462 = vmatpush2.bf16.xpose.msra.mxu0 0
        %1463 = vmatprep.mubr.bf16.mxu0 0
        %1464 = vmatmul.mubr.bf16.gmra.mxu0 %v1426
        %v1465 = vpop.f32.mrf.mxu0
        %v1466 = vadd.f32 0.0, %v1465
        %v1467 = vpop.f32.mrf.mxu0
        %v1468 = vpop.f32.mrf.mxu0
        %v1469 = vpop.f32.mrf.mxu0
        %1470 = vdwg.mxu0
        %v1472 = vsel %vm1424, %v1281, 0
        %v1475 = vsel %vm1424, %v1417, 0
        %1477 = vmatprep.subr.bf16.mxu0 0
        %1478 = vmatpush1.bf16.xpose.msra.mxu0 0
        %1479 = vmatprep.subr.bf16.mxu0 0
        %1480 = vmatpush1.bf16.xpose.msra.mxu0 0
        %1481 = vmatprep.subr.bf16.mxu0 0
        %1482 = vmatpush1.bf16.xpose.msra.mxu0 0
        %1483 = vmatprep.subr.bf16.mxu0 0
        %1484 = vmatpush1.bf16.xpose.msra.mxu0 0
        %1485 = vmatprep.subr.bf16.mxu0 0
        %1486 = vmatpush1.bf16.xpose.msra.mxu0 0
        %1487 = vmatprep.subr.bf16.mxu0 0
        %1488 = vmatpush1.bf16.xpose.msra.mxu0 0
        %1489 = vmatprep.subr.bf16.mxu0 0
        %1490 = vmatpush1.bf16.xpose.msra.mxu0 0
        %1491 = vmatprep.subr.bf16.mxu0 0
        %1492 = vmatpush1.bf16.xpose.msra.mxu0 %v1475
        %1493 = vmatprep.subr.bf16.mxu0 0
        %1494 = vmatpush2.bf16.xpose.msra.mxu0 0
        %1495 = vmatprep.subr.bf16.mxu0 0
        %1496 = vmatpush2.bf16.xpose.msra.mxu0 0
        %1497 = vmatprep.subr.bf16.mxu0 0
        %1498 = vmatpush2.bf16.xpose.msra.mxu0 0
        %1499 = vmatprep.subr.bf16.mxu0 0
        %1500 = vmatpush2.bf16.xpose.msra.mxu0 0
        %1501 = vmatprep.subr.bf16.mxu0 0
        %1502 = vmatpush2.bf16.xpose.msra.mxu0 0
        %1503 = vmatprep.subr.bf16.mxu0 0
        %1504 = vmatpush2.bf16.xpose.msra.mxu0 0
        %1505 = vmatprep.subr.bf16.mxu0 0
        %1506 = vmatpush2.bf16.xpose.msra.mxu0 0
        %1507 = vmatprep.subr.bf16.mxu0 0
        %1508 = vmatpush2.bf16.xpose.msra.mxu0 0
        %1509 = vmatprep.mubr.bf16.mxu0 0
        %1510 = vmatmul.mubr.bf16.gmra.mxu0 %v1472
        %v1511 = vpop.f32.mrf.mxu0
        %v1512 = vadd.f32 0.0, %v1511
        %v1513 = vpop.f32.mrf.mxu0
        %v1514 = vpop.f32.mrf.mxu0
        %v1515 = vpop.f32.mrf.mxu0
        %1516 = vdwg.mxu0
        %v1518 = vsel %vm1424, %v1348, 0
        %v1521 = vsel %vm1424, %v1418, 0
        %1523 = vmatprep.subr.bf16.mxu0 0
        %1524 = vmatpush1.bf16.xpose.msra.mxu0 0
        %1525 = vmatprep.subr.bf16.mxu0 0
        %1526 = vmatpush1.bf16.xpose.msra.mxu0 0
        %1527 = vmatprep.subr.bf16.mxu0 0
        %1528 = vmatpush1.bf16.xpose.msra.mxu0 0
        %1529 = vmatprep.subr.bf16.mxu0 0
        %1530 = vmatpush1.bf16.xpose.msra.mxu0 0
        %1531 = vmatprep.subr.bf16.mxu0 0
        %1532 = vmatpush1.bf16.xpose.msra.mxu0 0
        %1533 = vmatprep.subr.bf16.mxu0 0
        %1534 = vmatpush1.bf16.xpose.msra.mxu0 0
        %1535 = vmatprep.subr.bf16.mxu0 0
        %1536 = vmatpush1.bf16.xpose.msra.mxu0 0
        %1537 = vmatprep.subr.bf16.mxu0 0
        %1538 = vmatpush1.bf16.xpose.msra.mxu0 %v1521
        %1539 = vmatprep.subr.bf16.mxu0 0
        %1540 = vmatpush2.bf16.xpose.msra.mxu0 0
        %1541 = vmatprep.subr.bf16.mxu0 0
        %1542 = vmatpush2.bf16.xpose.msra.mxu0 0
        %1543 = vmatprep.subr.bf16.mxu0 0
        %1544 = vmatpush2.bf16.xpose.msra.mxu0 0
        %1545 = vmatprep.subr.bf16.mxu0 0
        %1546 = vmatpush2.bf16.xpose.msra.mxu0 0
        %1547 = vmatprep.subr.bf16.mxu0 0
        %1548 = vmatpush2.bf16.xpose.msra.mxu0 0
        %1549 = vmatprep.subr.bf16.mxu0 0
        %1550 = vmatpush2.bf16.xpose.msra.mxu0 0
        %1551 = vmatprep.subr.bf16.mxu0 0
        %1552 = vmatpush2.bf16.xpose.msra.mxu0 0
        %1553 = vmatprep.subr.bf16.mxu0 0
        %1554 = vmatpush2.bf16.xpose.msra.mxu0 0
        %1555 = vmatprep.mubr.bf16.mxu0 0
        %1556 = vmatmul.mubr.bf16.gmra.mxu0 %v1518
        %v1557 = vpop.f32.mrf.mxu0
        %v1558 = vadd.f32 0.0, %v1557
        %v1559 = vpop.f32.mrf.mxu0
        %v1560 = vpop.f32.mrf.mxu0
        %v1561 = vpop.f32.mrf.mxu0
        %1562 = vdwg.mxu0
        %v1564 = vsel %vm1424, %v1415, 0
        %v1567 = vsel %vm1424, %v1419, 0
        %1569 = vmatprep.subr.bf16.mxu0 0
        %1570 = vmatpush1.bf16.xpose.msra.mxu0 0
        %1571 = vmatprep.subr.bf16.mxu0 0
        %1572 = vmatpush1.bf16.xpose.msra.mxu0 0
        %1573 = vmatprep.subr.bf16.mxu0 0
        %1574 = vmatpush1.bf16.xpose.msra.mxu0 0
        %1575 = vmatprep.subr.bf16.mxu0 0
        %1576 = vmatpush1.bf16.xpose.msra.mxu0 0
        %1577 = vmatprep.subr.bf16.mxu0 0
        %1578 = vmatpush1.bf16.xpose.msra.mxu0 0
        %1579 = vmatprep.subr.bf16.mxu0 0
        %1580 = vmatpush1.bf16.xpose.msra.mxu0 0
        %1581 = vmatprep.subr.bf16.mxu0 0
        %1582 = vmatpush1.bf16.xpose.msra.mxu0 0
        %1583 = vmatprep.subr.bf16.mxu0 0
        %1584 = vmatpush1.bf16.xpose.msra.mxu0 %v1567
        %1585 = vmatprep.subr.bf16.mxu0 0
        %1586 = vmatpush2.bf16.xpose.msra.mxu0 0
        %1587 = vmatprep.subr.bf16.mxu0 0
        %1588 = vmatpush2.bf16.xpose.msra.mxu0 0
        %1589 = vmatprep.subr.bf16.mxu0 0
        %1590 = vmatpush2.bf16.xpose.msra.mxu0 0
        %1591 = vmatprep.subr.bf16.mxu0 0
        %1592 = vmatpush2.bf16.xpose.msra.mxu0 0
        %1593 = vmatprep.subr.bf16.mxu0 0
        %1594 = vmatpush2.bf16.xpose.msra.mxu0 0
        %1595 = vmatprep.subr.bf16.mxu0 0
        %1596 = vmatpush2.bf16.xpose.msra.mxu0 0
        %1597 = vmatprep.subr.bf16.mxu0 0
        %1598 = vmatpush2.bf16.xpose.msra.mxu0 0
        %1599 = vmatprep.subr.bf16.mxu0 0
        %1600 = vmatpush2.bf16.xpose.msra.mxu0 0
        %1601 = vmatprep.mubr.bf16.mxu0 0
        %1602 = vmatmul.mubr.bf16.gmra.mxu0 %v1564
        %v1603 = vpop.f32.mrf.mxu0
        %v1604 = vadd.f32 0.0, %v1603
        %v1605 = vpop.f32.mrf.mxu0
        %v1606 = vpop.f32.mrf.mxu0
        %v1607 = vpop.f32.mrf.mxu0
        %1608 = vdwg.mxu0
        %v1609 = vsel %vm1424, %v1466, -inf
        %1610 = vmax.xlane.f32.xlu0 %v1609
        %v1611 = vpop.xlane.xlu0 %1610
        %v1612 = vsel %vm1424, %v1512, -inf
        %1613 = vmax.xlane.f32.xlu0 %v1612
        %v1614 = vpop.xlane.xlu0 %1613
        %v1615 = vsel %vm1424, %v1558, -inf
        %1616 = vmax.xlane.f32.xlu0 %v1615
        %v1617 = vpop.xlane.xlu0 %1616
        %v1618 = vsel %vm1424, %v1604, -inf
        %1619 = vmax.xlane.f32.xlu0 %v1618
        %v1620 = vpop.xlane.xlu0 %1619
        %v1621 = vsub.f32 %v1466, %v1611
        %v1622 = vsub.f32 %v1512, %v1614
        %v1623 = vsub.f32 %v1558, %v1617
        %v1624 = vsub.f32 %v1604, %v1620
        %v1625 = vmul.f32 %v1621, 1.442695
        %v1626 = vpow.pop %v1625
        %v1627 = vmul.f32 %v1622, 1.442695
        %v1628 = vpow.pop %v1627
        %v1629 = vmul.f32 %v1623, 1.442695
        %v1630 = vpow.pop %v1629
        %v1631 = vmul.f32 %v1624, 1.442695
        %v1632 = vpow.pop %v1631
        %v1633 = vsel %vm1424, %v1626, 0.0
        %1634 = vadd.xlane.f32.xlu0 %v1633
        %v1635 = vpop.xlane.xlu0 %1634
        %v1636 = vsel %vm1424, %v1628, 0.0
        %1637 = vadd.xlane.f32.xlu0 %v1636
        %v1638 = vpop.xlane.xlu0 %1637
        %v1639 = vsel %vm1424, %v1630, 0.0
        %1640 = vadd.xlane.f32.xlu0 %v1639
        %v1641 = vpop.xlane.xlu0 %1640
        %v1642 = vsel %vm1424, %v1632, 0.0
        %1643 = vadd.xlane.f32.xlu0 %v1642
        %v1644 = vpop.xlane.xlu0 %1643
        %v1645 = vrcp.pop %v1635
        %v1646 = vrcp.pop %v1638
        %v1647 = vrcp.pop %v1641
        %v1648 = vrcp.pop %v1644
        %v1649 = vpack.c.bf16 %v1626, %v1626
        %v1650 = vpack.c.bf16 %v1628, %v1628
        %v1651 = vpack.c.bf16 %v1630, %v1630
        %v1652 = vpack.c.bf16 %v1632, %v1632
        %v1654 = vsel %vm1424, %v1649, 0
        %vm1656 = vcmask 1043456
        %v1658 = vsel %vm1656, %v1420, 0
        %1660 = vmatprep.subr.bf16.mxu0 0
        %1661 = vmatpush1.bf16.msra.mxu0 0
        %1662 = vmatprep.subr.bf16.mxu0 0
        %1663 = vmatpush1.bf16.msra.mxu0 0
        %1664 = vmatprep.subr.bf16.mxu0 0
        %1665 = vmatpush1.bf16.msra.mxu0 0
        %1666 = vmatprep.subr.bf16.mxu0 0
        %1667 = vmatpush1.bf16.msra.mxu0 0
        %1668 = vmatprep.subr.bf16.mxu0 0
        %1669 = vmatpush1.bf16.msra.mxu0 0
        %1670 = vmatprep.subr.bf16.mxu0 0
        %1671 = vmatpush1.bf16.msra.mxu0 0
        %1672 = vmatprep.subr.bf16.mxu0 0
        %1673 = vmatpush1.bf16.msra.mxu0 0
        %1674 = vmatprep.subr.bf16.mxu0 0
        %1675 = vmatpush1.bf16.msra.mxu0 %v1658
        %1676 = vmatprep.subr.bf16.mxu0 0
        %1677 = vmatpush2.bf16.msra.mxu0 0
        %1678 = vmatprep.subr.bf16.mxu0 0
        %1679 = vmatpush2.bf16.msra.mxu0 0
        %1680 = vmatprep.subr.bf16.mxu0 0
        %1681 = vmatpush2.bf16.msra.mxu0 0
        %1682 = vmatprep.subr.bf16.mxu0 0
        %1683 = vmatpush2.bf16.msra.mxu0 0
        %1684 = vmatprep.subr.bf16.mxu0 0
        %1685 = vmatpush2.bf16.msra.mxu0 0
        %1686 = vmatprep.subr.bf16.mxu0 0
        %1687 = vmatpush2.bf16.msra.mxu0 0
        %1688 = vmatprep.subr.bf16.mxu0 0
        %1689 = vmatpush2.bf16.msra.mxu0 0
        %1690 = vmatprep.subr.bf16.mxu0 0
        %1691 = vmatpush2.bf16.msra.mxu0 0
        %1692 = vmatprep.mubr.bf16.mxu0 0
        %1693 = vmatmul.mubr.bf16.gmra.mxu0 %v1654
        %v1694 = vpop.f32.mrf.mxu0
        %v1695 = vadd.f32 0.0, %v1694
        %v1696 = vpop.f32.mrf.mxu0
        %v1697 = vpop.f32.mrf.mxu0
        %v1698 = vpop.f32.mrf.mxu0
        %1699 = vdwg.mxu0
        %v1701 = vsel %vm1424, %v1650, 0
        %v1704 = vsel %vm1656, %v1421, 0
        %1706 = vmatprep.subr.bf16.mxu0 0
        %1707 = vmatpush1.bf16.msra.mxu0 0
        %1708 = vmatprep.subr.bf16.mxu0 0
        %1709 = vmatpush1.bf16.msra.mxu0 0
        %1710 = vmatprep.subr.bf16.mxu0 0
        %1711 = vmatpush1.bf16.msra.mxu0 0
        %1712 = vmatprep.subr.bf16.mxu0 0
        %1713 = vmatpush1.bf16.msra.mxu0 0
        %1714 = vmatprep.subr.bf16.mxu0 0
        %1715 = vmatpush1.bf16.msra.mxu0 0
        %1716 = vmatprep.subr.bf16.mxu0 0
        %1717 = vmatpush1.bf16.msra.mxu0 0
        %1718 = vmatprep.subr.bf16.mxu0 0
        %1719 = vmatpush1.bf16.msra.mxu0 0
        %1720 = vmatprep.subr.bf16.mxu0 0
        %1721 = vmatpush1.bf16.msra.mxu0 %v1704
        %1722 = vmatprep.subr.bf16.mxu0 0
        %1723 = vmatpush2.bf16.msra.mxu0 0
        %1724 = vmatprep.subr.bf16.mxu0 0
        %1725 = vmatpush2.bf16.msra.mxu0 0
        %1726 = vmatprep.subr.bf16.mxu0 0
        %1727 = vmatpush2.bf16.msra.mxu0 0
        %1728 = vmatprep.subr.bf16.mxu0 0
        %1729 = vmatpush2.bf16.msra.mxu0 0
        %1730 = vmatprep.subr.bf16.mxu0 0
        %1731 = vmatpush2.bf16.msra.mxu0 0
        %1732 = vmatprep.subr.bf16.mxu0 0
        %1733 = vmatpush2.bf16.msra.mxu0 0
        %1734 = vmatprep.subr.bf16.mxu0 0
        %1735 = vmatpush2.bf16.msra.mxu0 0
        %1736 = vmatprep.subr.bf16.mxu0 0
        %1737 = vmatpush2.bf16.msra.mxu0 0
        %1738 = vmatprep.mubr.bf16.mxu0 0
        %1739 = vmatmul.mubr.bf16.gmra.mxu0 %v1701
        %v1740 = vpop.f32.mrf.mxu0
        %v1741 = vadd.f32 0.0, %v1740
        %v1742 = vpop.f32.mrf.mxu0
        %v1743 = vpop.f32.mrf.mxu0
        %v1744 = vpop.f32.mrf.mxu0
        %1745 = vdwg.mxu0
        %v1747 = vsel %vm1424, %v1651, 0
        %v1750 = vsel %vm1656, %v1422, 0
        %1752 = vmatprep.subr.bf16.mxu0 0
        %1753 = vmatpush1.bf16.msra.mxu0 0
        %1754 = vmatprep.subr.bf16.mxu0 0
        %1755 = vmatpush1.bf16.msra.mxu0 0
        %1756 = vmatprep.subr.bf16.mxu0 0
        %1757 = vmatpush1.bf16.msra.mxu0 0
        %1758 = vmatprep.subr.bf16.mxu0 0
        %1759 = vmatpush1.bf16.msra.mxu0 0
        %1760 = vmatprep.subr.bf16.mxu0 0
        %1761 = vmatpush1.bf16.msra.mxu0 0
        %1762 = vmatprep.subr.bf16.mxu0 0
        %1763 = vmatpush1.bf16.msra.mxu0 0
        %1764 = vmatprep.subr.bf16.mxu0 0
        %1765 = vmatpush1.bf16.msra.mxu0 0
        %1766 = vmatprep.subr.bf16.mxu0 0
        %1767 = vmatpush1.bf16.msra.mxu0 %v1750
        %1768 = vmatprep.subr.bf16.mxu0 0
        %1769 = vmatpush2.bf16.msra.mxu0 0
        %1770 = vmatprep.subr.bf16.mxu0 0
        %1771 = vmatpush2.bf16.msra.mxu0 0
        %1772 = vmatprep.subr.bf16.mxu0 0
        %1773 = vmatpush2.bf16.msra.mxu0 0
        %1774 = vmatprep.subr.bf16.mxu0 0
        %1775 = vmatpush2.bf16.msra.mxu0 0
        %1776 = vmatprep.subr.bf16.mxu0 0
        %1777 = vmatpush2.bf16.msra.mxu0 0
        %1778 = vmatprep.subr.bf16.mxu0 0
        %1779 = vmatpush2.bf16.msra.mxu0 0
        %1780 = vmatprep.subr.bf16.mxu0 0
        %1781 = vmatpush2.bf16.msra.mxu0 0
        %1782 = vmatprep.subr.bf16.mxu0 0
        %1783 = vmatpush2.bf16.msra.mxu0 0
        %1784 = vmatprep.mubr.bf16.mxu0 0
        %1785 = vmatmul.mubr.bf16.gmra.mxu0 %v1747
        %v1786 = vpop.f32.mrf.mxu0
        %v1787 = vadd.f32 0.0, %v1786
        %v1788 = vpop.f32.mrf.mxu0
        %v1789 = vpop.f32.mrf.mxu0
        %v1790 = vpop.f32.mrf.mxu0
        %1791 = vdwg.mxu0
        %v1793 = vsel %vm1424, %v1652, 0
        %v1796 = vsel %vm1656, %v1423, 0
        %1798 = vmatprep.subr.bf16.mxu0 0
        %1799 = vmatpush1.bf16.msra.mxu0 0
        %1800 = vmatprep.subr.bf16.mxu0 0
        %1801 = vmatpush1.bf16.msra.mxu0 0
        %1802 = vmatprep.subr.bf16.mxu0 0
        %1803 = vmatpush1.bf16.msra.mxu0 0
        %1804 = vmatprep.subr.bf16.mxu0 0
        %1805 = vmatpush1.bf16.msra.mxu0 0
        %1806 = vmatprep.subr.bf16.mxu0 0
        %1807 = vmatpush1.bf16.msra.mxu0 0
        %1808 = vmatprep.subr.bf16.mxu0 0
        %1809 = vmatpush1.bf16.msra.mxu0 0
        %1810 = vmatprep.subr.bf16.mxu0 0
        %1811 = vmatpush1.bf16.msra.mxu0 0
        %1812 = vmatprep.subr.bf16.mxu0 0
        %1813 = vmatpush1.bf16.msra.mxu0 %v1796
        %1814 = vmatprep.subr.bf16.mxu0 0
        %1815 = vmatpush2.bf16.msra.mxu0 0
        %1816 = vmatprep.subr.bf16.mxu0 0
        %1817 = vmatpush2.bf16.msra.mxu0 0
        %1818 = vmatprep.subr.bf16.mxu0 0
        %1819 = vmatpush2.bf16.msra.mxu0 0
        %1820 = vmatprep.subr.bf16.mxu0 0
        %1821 = vmatpush2.bf16.msra.mxu0 0
        %1822 = vmatprep.subr.bf16.mxu0 0
        %1823 = vmatpush2.bf16.msra.mxu0 0
        %1824 = vmatprep.subr.bf16.mxu0 0
        %1825 = vmatpush2.bf16.msra.mxu0 0
        %1826 = vmatprep.subr.bf16.mxu0 0
        %1827 = vmatpush2.bf16.msra.mxu0 0
        %1828 = vmatprep.subr.bf16.mxu0 0
        %1829 = vmatpush2.bf16.msra.mxu0 0
        %1830 = vmatprep.mubr.bf16.mxu0 0
        %1831 = vmatmul.mubr.bf16.gmra.mxu0 %v1793
        %v1832 = vpop.f32.mrf.mxu0
        %v1833 = vadd.f32 0.0, %v1832
        %v1834 = vpop.f32.mrf.mxu0
        %v1835 = vpop.f32.mrf.mxu0
        %v1836 = vpop.f32.mrf.mxu0
        %1837 = vdwg.mxu0
        %v1838 = vmul.f32 %v1695, %v1645
        %v1839 = vmul.f32 %v1741, %v1646
        %v1840 = vmul.f32 %v1787, %v1647
        %v1841 = vmul.f32 %v1833, %v1648
        %v1842 = vpack.c.bf16 %v1838, %v1838
        %v1843 = vpack.c.bf16 %v1839, %v1839
        %v1844 = vpack.c.bf16 %v1840, %v1840
        %v1845 = vpack.c.bf16 %v1841, %v1841
        %v1846 = vld [vmem:[%s7] sm:$0xf]
        %s1847 = scalar_lea.vmem %s7, 4
        %v1848 = vld [vmem:[%s1847] sm:$0xf]
        %v1850 = vsel %vm1424, %v1843, 0
        %v1853 = vsel %vm1656, %v1848, 0
        %1855 = vmatprep.subr.bf16.mxu0 0
        %1856 = vmatpush1.bf16.msra.mxu0 0
        %1857 = vmatprep.subr.bf16.mxu0 0
        %1858 = vmatpush1.bf16.msra.mxu0 0
        %1859 = vmatprep.subr.bf16.mxu0 0
        %1860 = vmatpush1.bf16.msra.mxu0 0
        %1861 = vmatprep.subr.bf16.mxu0 0
        %1862 = vmatpush1.bf16.msra.mxu0 0
        %1863 = vmatprep.subr.bf16.mxu0 0
        %1864 = vmatpush1.bf16.msra.mxu0 0
        %1865 = vmatprep.subr.bf16.mxu0 0
        %1866 = vmatpush1.bf16.msra.mxu0 0
        %1867 = vmatprep.subr.bf16.mxu0 0
        %1868 = vmatpush1.bf16.msra.mxu0 0
        %1869 = vmatprep.subr.bf16.mxu0 0
        %1870 = vmatpush1.bf16.msra.mxu0 %v1853
        %1871 = vmatprep.subr.bf16.mxu0 0
        %1872 = vmatpush2.bf16.msra.mxu0 0
        %1873 = vmatprep.subr.bf16.mxu0 0
        %1874 = vmatpush2.bf16.msra.mxu0 0
        %1875 = vmatprep.subr.bf16.mxu0 0
        %1876 = vmatpush2.bf16.msra.mxu0 0
        %1877 = vmatprep.subr.bf16.mxu0 0
        %1878 = vmatpush2.bf16.msra.mxu0 0
        %1879 = vmatprep.subr.bf16.mxu0 0
        %1880 = vmatpush2.bf16.msra.mxu0 0
        %1881 = vmatprep.subr.bf16.mxu0 0
        %1882 = vmatpush2.bf16.msra.mxu0 0
        %1883 = vmatprep.subr.bf16.mxu0 0
        %1884 = vmatpush2.bf16.msra.mxu0 0
        %1885 = vmatprep.subr.bf16.mxu0 0
        %1886 = vmatpush2.bf16.msra.mxu0 0
        %1887 = vmatprep.mubr.bf16.mxu0 0
        %1888 = vmatmul.mubr.bf16.gmra.mxu0 %v1850
        %v1889 = vpop.f32.mrf.mxu0
        %v1890 = vadd.f32 0.0, %v1889
        %v1891 = vpop.f32.mrf.mxu0
        %v1892 = vpop.f32.mrf.mxu0
        %v1893 = vpop.f32.mrf.mxu0
        %1894 = vdwg.mxu0
        %v1896 = vsel %vm1424, %v1842, 0
        %v1899 = vsel %vm1656, %v1846, 0
        %1901 = vmatprep.subr.bf16.mxu0 0
        %1902 = vmatpush1.bf16.msra.mxu0 0
        %1903 = vmatprep.subr.bf16.mxu0 0
        %1904 = vmatpush1.bf16.msra.mxu0 0
        %1905 = vmatprep.subr.bf16.mxu0 0
        %1906 = vmatpush1.bf16.msra.mxu0 0
        %1907 = vmatprep.subr.bf16.mxu0 0
        %1908 = vmatpush1.bf16.msra.mxu0 0
        %1909 = vmatprep.subr.bf16.mxu0 0
        %1910 = vmatpush1.bf16.msra.mxu0 0
        %1911 = vmatprep.subr.bf16.mxu0 0
        %1912 = vmatpush1.bf16.msra.mxu0 0
        %1913 = vmatprep.subr.bf16.mxu0 0
        %1914 = vmatpush1.bf16.msra.mxu0 0
        %1915 = vmatprep.subr.bf16.mxu0 0
        %1916 = vmatpush1.bf16.msra.mxu0 %v1899
        %1917 = vmatprep.subr.bf16.mxu0 0
        %1918 = vmatpush2.bf16.msra.mxu0 0
        %1919 = vmatprep.subr.bf16.mxu0 0
        %1920 = vmatpush2.bf16.msra.mxu0 0
        %1921 = vmatprep.subr.bf16.mxu0 0
        %1922 = vmatpush2.bf16.msra.mxu0 0
        %1923 = vmatprep.subr.bf16.mxu0 0
        %1924 = vmatpush2.bf16.msra.mxu0 0
        %1925 = vmatprep.subr.bf16.mxu0 0
        %1926 = vmatpush2.bf16.msra.mxu0 0
        %1927 = vmatprep.subr.bf16.mxu0 0
        %1928 = vmatpush2.bf16.msra.mxu0 0
        %1929 = vmatprep.subr.bf16.mxu0 0
        %1930 = vmatpush2.bf16.msra.mxu0 0
        %1931 = vmatprep.subr.bf16.mxu0 0
        %1932 = vmatpush2.bf16.msra.mxu0 0
        %1933 = vmatprep.mubr.bf16.mxu0 0
        %1934 = vmatmul.mubr.bf16.gmra.mxu0 %v1896
        %v1935 = vpop.f32.mrf.mxu0
        %v1936 = vadd.f32 %v1890, %v1935
        %v1937 = vpop.f32.mrf.mxu0
        %v1938 = vpop.f32.mrf.mxu0
        %v1939 = vpop.f32.mrf.mxu0
        %1940 = vdwg.mxu0
        %s1941 = scalar_lea.vmem %s7, 8
        %v1942 = vld [vmem:[%s1941] sm:$0xf]
        %v1944 = vsel %vm1424, %v1844, 0
        %v1947 = vsel %vm1656, %v1942, 0
        %1949 = vmatprep.subr.bf16.mxu0 0
        %1950 = vmatpush1.bf16.msra.mxu0 0
        %1951 = vmatprep.subr.bf16.mxu0 0
        %1952 = vmatpush1.bf16.msra.mxu0 0
        %1953 = vmatprep.subr.bf16.mxu0 0
        %1954 = vmatpush1.bf16.msra.mxu0 0
        %1955 = vmatprep.subr.bf16.mxu0 0
        %1956 = vmatpush1.bf16.msra.mxu0 0
        %1957 = vmatprep.subr.bf16.mxu0 0
        %1958 = vmatpush1.bf16.msra.mxu0 0
        %1959 = vmatprep.subr.bf16.mxu0 0
        %1960 = vmatpush1.bf16.msra.mxu0 0
        %1961 = vmatprep.subr.bf16.mxu0 0
        %1962 = vmatpush1.bf16.msra.mxu0 0
        %1963 = vmatprep.subr.bf16.mxu0 0
        %1964 = vmatpush1.bf16.msra.mxu0 %v1947
        %1965 = vmatprep.subr.bf16.mxu0 0
        %1966 = vmatpush2.bf16.msra.mxu0 0
        %1967 = vmatprep.subr.bf16.mxu0 0
        %1968 = vmatpush2.bf16.msra.mxu0 0
        %1969 = vmatprep.subr.bf16.mxu0 0
        %1970 = vmatpush2.bf16.msra.mxu0 0
        %1971 = vmatprep.subr.bf16.mxu0 0
        %1972 = vmatpush2.bf16.msra.mxu0 0
        %1973 = vmatprep.subr.bf16.mxu0 0
        %1974 = vmatpush2.bf16.msra.mxu0 0
        %1975 = vmatprep.subr.bf16.mxu0 0
        %1976 = vmatpush2.bf16.msra.mxu0 0
        %1977 = vmatprep.subr.bf16.mxu0 0
        %1978 = vmatpush2.bf16.msra.mxu0 0
        %1979 = vmatprep.subr.bf16.mxu0 0
        %1980 = vmatpush2.bf16.msra.mxu0 0
        %1981 = vmatprep.mubr.bf16.mxu0 0
        %1982 = vmatmul.mubr.bf16.gmra.mxu0 %v1944
        %v1983 = vpop.f32.mrf.mxu0
        %v1984 = vadd.f32 0.0, %v1983
        %v1985 = vpop.f32.mrf.mxu0
        %v1986 = vpop.f32.mrf.mxu0
        %v1987 = vpop.f32.mrf.mxu0
        %1988 = vdwg.mxu0
        %v1989 = vadd.f32 %v1936, %v1984
        %s1990 = scalar_lea.vmem %s7, 12
        %v1991 = vld [vmem:[%s1990] sm:$0xf]
        %v1993 = vsel %vm1424, %v1845, 0
        %v1996 = vsel %vm1656, %v1991, 0
        %1998 = vmatprep.subr.bf16.mxu0 0
        %1999 = vmatpush1.bf16.msra.mxu0 0
        %2000 = vmatprep.subr.bf16.mxu0 0
        %2001 = vmatpush1.bf16.msra.mxu0 0
        %2002 = vmatprep.subr.bf16.mxu0 0
        %2003 = vmatpush1.bf16.msra.mxu0 0
        %2004 = vmatprep.subr.bf16.mxu0 0
        %2005 = vmatpush1.bf16.msra.mxu0 0
        %2006 = vmatprep.subr.bf16.mxu0 0
        %2007 = vmatpush1.bf16.msra.mxu0 0
        %2008 = vmatprep.subr.bf16.mxu0 0
        %2009 = vmatpush1.bf16.msra.mxu0 0
        %2010 = vmatprep.subr.bf16.mxu0 0
        %2011 = vmatpush1.bf16.msra.mxu0 0
        %2012 = vmatprep.subr.bf16.mxu0 0
        %2013 = vmatpush1.bf16.msra.mxu0 %v1996
        %2014 = vmatprep.subr.bf16.mxu0 0
        %2015 = vmatpush2.bf16.msra.mxu0 0
        %2016 = vmatprep.subr.bf16.mxu0 0
        %2017 = vmatpush2.bf16.msra.mxu0 0
        %2018 = vmatprep.subr.bf16.mxu0 0
        %2019 = vmatpush2.bf16.msra.mxu0 0
        %2020 = vmatprep.subr.bf16.mxu0 0
        %2021 = vmatpush2.bf16.msra.mxu0 0
        %2022 = vmatprep.subr.bf16.mxu0 0
        %2023 = vmatpush2.bf16.msra.mxu0 0
        %2024 = vmatprep.subr.bf16.mxu0 0
        %2025 = vmatpush2.bf16.msra.mxu0 0
        %2026 = vmatprep.subr.bf16.mxu0 0
        %2027 = vmatpush2.bf16.msra.mxu0 0
        %2028 = vmatprep.subr.bf16.mxu0 0
        %2029 = vmatpush2.bf16.msra.mxu0 0
        %2030 = vmatprep.mubr.bf16.mxu0 0
        %2031 = vmatmul.mubr.bf16.gmra.mxu0 %v1993
        %v2032 = vpop.f32.mrf.mxu0
        %v2033 = vadd.f32 0.0, %v2032
        %v2034 = vpop.f32.mrf.mxu0
        %v2035 = vpop.f32.mrf.mxu0
        %v2036 = vpop.f32.mrf.mxu0
        %2037 = vdwg.mxu0
        %v2038 = vadd.f32 %v1989, %v2033
        %s2039 = scalar_lea.vmem %s557, %s1140
        %v2040 = vld [vmem:[%s2039] sm:$0xff]
        %v2041 = vadd.f32 %v2040, %v2038
        %v2042 = vld [vmem:[%s8] sm:$0x1]
        %v2044 = vlaneseq
        %v2045 = vshrl.u32 %v2044, 7
        %v2046 = vsub.s32 0, %v2045
        %v2047 = vrot.slane %v2042, %v2046
        %v2049 = vadd.f32 %v2041, %v2047
        %v2050 = vld [vmem:[%s11] sm:$0x1]
        %v2051 = vld [vmem:[%s12] sm:$0x1]
        %v2052 = vsel %vm1169, %v2049, 0.0
        %2053 = vadd.xlane.f32.xlu0 %v2052
        %v2054 = vpop.xlane.xlu0 %2053
        %v2055 = vrcp.pop 32.0
        %v2056 = vmul.f32 %v2054, %v2055
        %v2057 = vsub.f32 %v2049, %v2056
        %v2058 = vmul.f32 %v2057, %v2057
        %v2059 = vsel %vm1169, %v2058, 0.0
        %2060 = vadd.xlane.f32.xlu0 %v2059
        %v2061 = vpop.xlane.xlu0 %2060
        %v2062 = vmul.f32 %v2061, %v2055
        %v2063 = vadd.f32 %v2062, 1e-05
        %v2064 = vrsqrt.pop %v2063
        %v2065 = vmul.f32 %v2057, %v2064
        %v2067 = vlaneseq
        %v2068 = vshrl.u32 %v2067, 7
        %v2069 = vsub.s32 0, %v2068
        %v2070 = vrot.slane %v2050, %v2069
        %v2072 = vmul.f32 %v2065, %v2070
        %v2074 = vlaneseq
        %v2075 = vshrl.u32 %v2074, 7
        %v2076 = vsub.s32 0, %v2075
        %v2077 = vrot.slane %v2051, %v2076
        %v2079 = vadd.f32 %v2072, %v2077
        %v2080 = vpack.c.bf16 %v2079, %v2079
        %v2081 = vld [vmem:[%s13] sm:$0xf]
        %v2082 = vld [vmem:[%s13 + $0x4] sm:$0xf]
        %v2083 = vld [vmem:[%s13 + $0x8] sm:$0xf]
        %v2084 = vld [vmem:[%s13 + $0xc] sm:$0xf]
        %v2085 = vld [vmem:[%s14] sm:$0x1]
        %v2087 = vlaneseq
        %v2088 = vshrl.u32 %v2087, 7
        %v2089 = vsub.s32 0, %v2088
        %v2090 = vrot.slane %v2085, %v2089
        %v2096 = vunpack.c.l.b16 %v2081
        %v2097 = vunpack.c.l.b16 %v2082
        %v2098 = vunpack.c.l.b16 %v2083
        %v2099 = vunpack.c.l.b16 %v2084
        %v2100 = vpack.c.b16 %v2097, %v2096
        %v2101 = vpack.c.b16 %v2099, %v2098
        %v2105 = vsel %vm1169, %v2080, 0
        %2107 = vmatprep.subr.bf16.mxu0 0
        %2108 = vmatpush1.bf16.msra.mxu0 0
        %2109 = vmatprep.subr.bf16.mxu0 0
        %2110 = vmatpush1.bf16.msra.mxu0 0
        %2111 = vmatprep.subr.bf16.mxu0 0
        %2112 = vmatpush1.bf16.msra.mxu0 0
        %2113 = vmatprep.subr.bf16.mxu0 0
        %2114 = vmatpush1.bf16.msra.mxu0 0
        %2115 = vmatprep.subr.bf16.mxu0 0
        %2116 = vmatpush1.bf16.msra.mxu0 0
        %2117 = vmatprep.subr.bf16.mxu0 0
        %2118 = vmatpush1.bf16.msra.mxu0 0
        %2119 = vmatprep.subr.bf16.mxu0 0
        %2120 = vmatpush1.bf16.msra.mxu0 %v2101
        %2121 = vmatprep.subr.bf16.mxu0 0
        %2122 = vmatpush1.bf16.msra.mxu0 %v2100
        %2123 = vmatprep.subr.bf16.mxu0 0
        %2124 = vmatpush2.bf16.msra.mxu0 0
        %2125 = vmatprep.subr.bf16.mxu0 0
        %2126 = vmatpush2.bf16.msra.mxu0 0
        %2127 = vmatprep.subr.bf16.mxu0 0
        %2128 = vmatpush2.bf16.msra.mxu0 0
        %2129 = vmatprep.subr.bf16.mxu0 0
        %2130 = vmatpush2.bf16.msra.mxu0 0
        %2131 = vmatprep.subr.bf16.mxu0 0
        %2132 = vmatpush2.bf16.msra.mxu0 0
        %2133 = vmatprep.subr.bf16.mxu0 0
        %2134 = vmatpush2.bf16.msra.mxu0 0
        %2135 = vmatprep.subr.bf16.mxu0 0
        %2136 = vmatpush2.bf16.msra.mxu0 0
        %2137 = vmatprep.subr.bf16.mxu0 0
        %2138 = vmatpush2.bf16.msra.mxu0 0
        %2139 = vmatprep.mubr.bf16.mxu0 0
        %2140 = vmatmul.mubr.bf16.gmra.mxu0 %v2105
        %v2141 = vpop.f32.mrf.mxu0
        %v2142 = vadd.f32 %v2090, %v2141
        %v2143 = vpop.f32.mrf.mxu0
        %v2144 = vpop.f32.mrf.mxu0
        %v2145 = vpop.f32.mrf.mxu0
        %2146 = vdwg.mxu0
        %v2147 = vmax.f32 %v2142, 0.0
        %v2148 = vpack.c.bf16 %v2147, %v2147
        %v2149 = vld [vmem:[%s15] sm:$0xf]
        %v2150 = vld [vmem:[%s15 + $0x4] sm:$0xf]
        %v2151 = vld [vmem:[%s15 + $0x8] sm:$0xf]
        %v2152 = vld [vmem:[%s15 + $0xc] sm:$0xf]
        %v2153 = vld [vmem:[%s15 + $0x10] sm:$0xf]
        %v2154 = vld [vmem:[%s15 + $0x14] sm:$0xf]
        %v2155 = vld [vmem:[%s15 + $0x18] sm:$0xf]
        %v2156 = vld [vmem:[%s15 + $0x1c] sm:$0xf]
        %v2157 = vld [vmem:[%s15 + $0x20] sm:$0xf]
        %v2158 = vld [vmem:[%s15 + $0x24] sm:$0xf]
        %v2159 = vld [vmem:[%s15 + $0x28] sm:$0xf]
        %v2160 = vld [vmem:[%s15 + $0x2c] sm:$0xf]
        %v2161 = vld [vmem:[%s15 + $0x30] sm:$0xf]
        %v2162 = vld [vmem:[%s15 + $0x34] sm:$0xf]
        %v2163 = vld [vmem:[%s15 + $0x38] sm:$0xf]
        %v2164 = vld [vmem:[%s15 + $0x3c] sm:$0xf]
        %v2181 = vunpack.c.l.b16 %v2149
        %v2182 = vunpack.c.l.b16 %v2150
        %v2183 = vunpack.c.l.b16 %v2151
        %v2184 = vunpack.c.l.b16 %v2152
        %v2185 = vunpack.c.l.b16 %v2153
        %v2186 = vunpack.c.l.b16 %v2154
        %v2187 = vunpack.c.l.b16 %v2155
        %v2188 = vunpack.c.l.b16 %v2156
        %v2189 = vunpack.c.l.b16 %v2157
        %v2190 = vunpack.c.l.b16 %v2158
        %v2191 = vunpack.c.l.b16 %v2159
        %v2192 = vunpack.c.l.b16 %v2160
        %v2193 = vunpack.c.l.b16 %v2161
        %v2194 = vunpack.c.l.b16 %v2162
        %v2195 = vunpack.c.l.b16 %v2163
        %v2196 = vunpack.c.l.b16 %v2164
        %v2197 = vpack.c.b16 %v2182, %v2181
        %v2198 = vpack.c.b16 %v2184, %v2183
        %v2199 = vpack.c.b16 %v2186, %v2185
        %v2200 = vpack.c.b16 %v2188, %v2187
        %v2201 = vpack.c.b16 %v2190, %v2189
        %v2202 = vpack.c.b16 %v2192, %v2191
        %v2203 = vpack.c.b16 %v2194, %v2193
        %v2204 = vpack.c.b16 %v2196, %v2195
        %2213 = vmatprep.subr.bf16.mxu0 0
        %2214 = vmatpush1.bf16.msra.mxu0 %v2204
        %2215 = vmatprep.subr.bf16.mxu0 0
        %2216 = vmatpush1.bf16.msra.mxu0 %v2203
        %2217 = vmatprep.subr.bf16.mxu0 0
        %2218 = vmatpush1.bf16.msra.mxu0 %v2202
        %2219 = vmatprep.subr.bf16.mxu0 0
        %2220 = vmatpush1.bf16.msra.mxu0 %v2201
        %2221 = vmatprep.subr.bf16.mxu0 0
        %2222 = vmatpush1.bf16.msra.mxu0 %v2200
        %2223 = vmatprep.subr.bf16.mxu0 0
        %2224 = vmatpush1.bf16.msra.mxu0 %v2199
        %2225 = vmatprep.subr.bf16.mxu0 0
        %2226 = vmatpush1.bf16.msra.mxu0 %v2198
        %2227 = vmatprep.subr.bf16.mxu0 0
        %2228 = vmatpush1.bf16.msra.mxu0 %v2197
        %2229 = vmatprep.subr.bf16.mxu0 0
        %2230 = vmatpush2.bf16.msra.mxu0 0
        %2231 = vmatprep.subr.bf16.mxu0 0
        %2232 = vmatpush2.bf16.msra.mxu0 0
        %2233 = vmatprep.subr.bf16.mxu0 0
        %2234 = vmatpush2.bf16.msra.mxu0 0
        %2235 = vmatprep.subr.bf16.mxu0 0
        %2236 = vmatpush2.bf16.msra.mxu0 0
        %2237 = vmatprep.subr.bf16.mxu0 0
        %2238 = vmatpush2.bf16.msra.mxu0 0
        %2239 = vmatprep.subr.bf16.mxu0 0
        %2240 = vmatpush2.bf16.msra.mxu0 0
        %2241 = vmatprep.subr.bf16.mxu0 0
        %2242 = vmatpush2.bf16.msra.mxu0 0
        %2243 = vmatprep.subr.bf16.mxu0 0
        %2244 = vmatpush2.bf16.msra.mxu0 0
        %2245 = vmatprep.mubr.bf16.mxu0 0
        %2246 = vmatmul.mubr.bf16.gmra.mxu0 %v2148
        %v2247 = vpop.f32.mrf.mxu0
        %v2248 = vadd.f32 0.0, %v2247
        %v2249 = vpop.f32.mrf.mxu0
        %v2250 = vpop.f32.mrf.mxu0
        %v2251 = vpop.f32.mrf.mxu0
        %2252 = vdwg.mxu0
        %v2253 = vadd.f32 %v2049, %v2248
        %v2254 = vld [vmem:[%s16] sm:$0x1]
        %v2256 = vlaneseq
        %v2257 = vshrl.u32 %v2256, 7
        %v2258 = vsub.s32 0, %v2257
        %v2259 = vrot.slane %v2254, %v2258
        %v2261 = vadd.f32 %v2253, %v2259
        %2262 = vst.msk [vmem:[%s553] sm:$0xff] %vm1169, %v2261
        %s2263 = sand.u32 %s415, 1
        %s2264 = scalar_lea.sflag [#allocation6], %s2263
        %s2265 = sand.u32 %s415, 1
        %s2266 = smul.addr %s2265, 8
        %s2267 = scalar_lea.vmem [#allocation5], %s2266
        // Predicated region
        $region93: #{tpu_custom_call.1} parent=87 // pred_check
          %p2268 = pneg %p425
        $region94: #{tpu_custom_call.1} parent=87 // pred_check_branch
          %2270 = sbr.rel (%p2268) target = $region96
        $region95: #{tpu_custom_call.1} parent=87 // pred_region
          %s2272 = ssub.s32 128, 128
          %2273 = vsyncadd %s2264, %s2272
          %s2274 = sadd.s32 %s36, %s35
          %s2275 = smul.addr %s2274, 128
          %s2276 = scalar_lea.hbm %s17, %s2275
          %s2278 = sshll.u32 %s2267, 4
          %s2279 = int_to_ptr.vmem [resolvable:$true] %s2278
          %2281 = dma.vmem_to_hbm [thread:$0]  %s2279, 128, %s2276, %s2264
        $region96: #{tpu_custom_call.1} parent=87 // pred_fallthru
          _
      $region88: #{tpu_custom_call.1} parent=5 // pred_fallthru
        _
      %p2282 = scmp.le.s32.totalorder 2, %s26
      // Predicated region
      $region97: #{tpu_custom_call.1} parent=5 // pred_check
        %p2283 = pneg %p2282
      $region98: #{tpu_custom_call.1} parent=5 // pred_check_branch
        %2285 = sbr.rel (%p2283) target = $region100
      $region99: #{tpu_custom_call.1} parent=5 // pred_region
        %s2286 = ssub.s32 %s26, 2
        // Predicated region
        $region101: #{tpu_custom_call.1} parent=99 // pred_check
          %p2287 = pneg %p431
        $region102: #{tpu_custom_call.1} parent=99 // pred_check_branch
          %2289 = sbr.rel (%p2287) target = $region104
        $region103: #{tpu_custom_call.1} parent=99 // pred_region
          %s2290 = sand.u32 %s416, 1
          %s2291 = scalar_lea.sflag [#allocation6], %s2290
          %s2292 = sand.u32 %s416, 1
          %s2293 = smul.addr %s2292, 8
          %s2294 = scalar_lea.vmem [#allocation5], %s2293
          %2295 = dma.done %s2291, 128
        $region104: #{tpu_custom_call.1} parent=99 // pred_fallthru
          _
      $region100: #{tpu_custom_call.1} parent=5 // pred_fallthru
        _
    $region6: #{tpu_custom_call.1} parent=1 // loop_footer
      %s30 = sadd.s32 1, %s26
    $region7: #{tpu_custom_call.1} parent=1 // loop_footer_branch
      %25 = sbr.rel target = $region3
    $region8: #{tpu_custom_call.1} parent=1 // loop_exit
      _
    %2296 = vsyncpa [#allocation6], 1
    %s2297 = scalar_lea.sflag [#allocation6], 1
    %2298 = vsyncpa %s2297, 1

</llo_original>
